<compile_context>
chip_gen: v6e
topology: v6e:2x2x1
jax: 0.10.0
libtpu: 0.0.40
codegen_flags: <defaults>
</compile_context>

<pallas_src>
import jax
import jax.numpy as jnp
from jax.experimental import pallas as pl
from jax.experimental.pallas import tpu as pltpu

LN_EPS = 1e-5  # PyTorch nn.LayerNorm default


def _round_up(x, m):
    return ((x + m - 1) // m) * m


def _relu_layer_norm(h):
    """ReLU -> LayerNorm WITHOUT affine (gamma/beta pre-folded into the next
    Linear). Biased variance (PyTorch semantics), f32 math, single pass for
    the moments: mu = s1/N, var = s2/N - mu^2 (clamped at 0 for safety)."""
    h = jnp.maximum(h, 0.0)
    inv_n = 1.0 / h.shape[-1]
    s1 = jnp.sum(h, axis=-1, keepdims=True)
    s2 = jnp.sum(h * h, axis=-1, keepdims=True)
    mu = s1 * inv_n
    var = jnp.maximum(s2 * inv_n - mu * mu, 0.0)
    return (h - mu) * jax.lax.rsqrt(var + LN_EPS)


def value_net_kernel(
    x_ref,
    w1_ref, b1_ref,
    w2_ref, b2_ref,
    w3_ref, b3_ref,
    w4_ref, b4_ref,
    w5_ref, b5_ref,
    o_ref,
):
    # bf16 operands into the MXU, f32 accumulation; LN / ReLU / head in f32.
    x = x_ref[...].astype(jnp.bfloat16)

    # Block 1: Linear(S,512) -> ReLU -> LN (affine folded into layer 2)
    h = jnp.dot(x, w1_ref[...], preferred_element_type=jnp.float32) + b1_ref[...]
    h = _relu_layer_norm(h)

    # Block 2: Linear(512,512) -> ReLU -> LN (affine folded into layer 3)
    h = jnp.dot(h.astype(jnp.bfloat16), w2_ref[...],
                preferred_element_type=jnp.float32) + b2_ref[...]
    h = _relu_layer_norm(h)

    # Block 3: Linear(512,256) -> ReLU -> LN (affine folded into layer 4)
    h = jnp.dot(h.astype(jnp.bfloat16), w3_ref[...],
                preferred_element_type=jnp.float32) + b3_ref[...]
    h = _relu_layer_norm(h)

    # Block 4: Linear(256,256) -> ReLU -> LN (affine folded into the head)
    h = jnp.dot(h.astype(jnp.bfloat16), w4_ref[...],
                preferred_element_type=jnp.float32) + b4_ref[...]
    h = _relu_layer_norm(h)

    # Head: Linear(256,1). A 1-column MXU matmul wastes the result path, so
    # use a VPU multiply by the (1,256) weight row + XLU row-sum.
    out = jnp.sum(h * w5_ref[...], axis=-1, keepdims=True) + b5_ref[...]
    o_ref[...] = out.astype(o_ref.dtype)


def init_params(key, state_dim):
    """Raw f32 params matching the PyTorch module:
    xavier_normal_(weight, gain=0.1), bias=0, LayerNorm gamma=1 / beta=0.
    Weights are stored (fan_in, fan_out) so the forward computes x @ W."""

    def xavier_normal(k, fan_in, fan_out, gain=0.1):
        std = gain * jnp.sqrt(2.0 / (fan_in + fan_out))
        return std * jax.random.normal(k, (fan_in, fan_out), dtype=jnp.float32)

    dims = [(state_dim, 512), (512, 512), (512, 256), (256, 256), (256, 1)]
    keys = jax.random.split(key, len(dims))
    params = {}
    for idx, ((fi, fo), k) in enumerate(zip(dims, keys), start=1):
        params[f"w{idx}"] = xavier_normal(k, fi, fo)
        params[f"b{idx}"] = jnp.zeros((1, fo), dtype=jnp.float32)
        if idx <= 4:
            params[f"g{idx}"] = jnp.ones((1, fo), dtype=jnp.float32)
            params[f"be{idx}"] = jnp.zeros((1, fo), dtype=jnp.float32)
    return params


def prepare_params(raw, *, cast_matmul_to_bf16=True):
    """Fold each LayerNorm's affine (gamma, beta) into the FOLLOWING Linear,
    in f32 (per review: fold before the bf16 cast):
        (x_hat*g + be) @ W + b  ==  x_hat @ (g.T * W) + (be @ W + b)
    The last LN folds into the w5/b5 head. Matmul weights w1..w4 are then
    cast to bf16 (MXU-native); w5 becomes a (1,256) f32 row for the VPU head;
    biases stay f32."""
    fw = [raw["w1"]]
    fb = [raw["b1"]]
    for i in range(2, 6):
        g = raw[f"g{i-1}"]      # (1, fan_in of layer i)
        be = raw[f"be{i-1}"]
        fw.append(raw[f"w{i}"] * g.T)           # scale row j of W_i by gamma_j
        fb.append(raw[f"b{i}"] + be @ raw[f"w{i}"])
    fused = {}
    for i in range(4):
        w = fw[i]
        fused[f"w{i+1}"] = w.astype(jnp.bfloat16) if cast_matmul_to_bf16 else w
        fused[f"b{i+1}"] = fb[i]
    fused["w5"] = fw[4].T        # (1, 256) f32 row for the VPU head
    fused["b5"] = fb[4]          # (1, 1)
    return fused


def _select_tile(B, tile_b):
    # 16-row alignment (bf16 packs 16 rows per sublane group).
    tb = _round_up(min(tile_b, _round_up(B, 16)), 16)
    # v7x megacore: guarantee >= 2 grid steps over the "parallel" batch axis
    # when there is enough work to split (neutral on single-TC v5e/v6e).
    if B > 256 and -(-B // tb) < 2:
        tb = _round_up(-(-B // 2), 16)
    Bp = _round_up(B, tb)
    return tb, Bp


def _vmem_limit_bytes(tb, S):
    # Deliberate scoped-VMEM budget: v7x = 64 MiB physical / 32 MiB scoped
    # default; v5e scoped default = 16 MiB. Estimate live bytes generously
    # (resident bf16 weights + double-buffered x/out tiles + f32
    # intermediates) and clamp to a range that is safe on every generation.
    param_bytes = 2 * (S * 512 + 512 * 512 + 512 * 256 + 256 * 256)   # bf16 W
    param_bytes += 4 * (3 * 512 + 2 * 256 + 256 + 1)                  # f32 b / head
    io_bytes = 2 * tb * S * 4 + 2 * tb * 4            # double-buffered x, out
    scratch_bytes = 8 * tb * 512 * 4                   # live intermediates
    est = param_bytes + io_bytes + scratch_bytes
    return int(min(max(est, 32 << 20), 56 << 20))


def value_network_forward(state, fused_params, *, tile_b=1024):
    """state: (B, state_dim) f32; fused_params: output of prepare_params().
    Returns (B, 1) f32."""
    B, S = state.shape
    tb, Bp = _select_tile(B, tile_b)
    # Ragged batches are zero-padded to a tile multiple and sliced back
    # (LayerNorm is per-row; padded rows stay finite via LN_EPS).
    x = state if Bp == B else jnp.pad(state, ((0, Bp - B), (0, 0)))

    args = (
        x,
        fused_params["w1"], fused_params["b1"],
        fused_params["w2"], fused_params["b2"],
        fused_params["w3"], fused_params["b3"],
        fused_params["w4"], fused_params["b4"],
        fused_params["w5"], fused_params["b5"],
    )

    # x / out are tiled along batch; every parameter uses a constant
    # index_map (block == full array) so it is loaded once and stays resident
    # in VMEM across grid steps while x/out are pipelined behind compute.
    x_spec = pl.BlockSpec((tb, S), lambda i: (i, 0))
    param_specs = [pl.BlockSpec(p.shape, lambda i: (0, 0)) for p in args[1:]]
    out_spec = pl.BlockSpec((tb, 1), lambda i: (i, 0))

    out = pl.pallas_call(
        value_net_kernel,
        out_shape=jax.ShapeDtypeStruct((Bp, 1), jnp.float32),
        grid_spec=pltpu.PrefetchScalarGridSpec(
            num_scalar_prefetch=0,
            grid=(Bp // tb,),
            in_specs=[x_spec] + param_specs,
            out_specs=out_spec,
        ),
        compiler_params=pltpu.CompilerParams(
            dimension_semantics=("parallel",),       # megacore sharding (v7x)
            vmem_limit_bytes=_vmem_limit_bytes(tb, S),
        ),
    )(*args)

    return out[:B]


def reference_forward(state, raw_params, *, mixed_precision=True):
    """Plain-JAX mirror of the PyTorch module on the RAW (unfolded) params.
    mixed_precision=True mirrors the kernel's bf16-matmul / f32-accumulate."""
    h = state
    for i in range(1, 5):
        w = raw_params[f"w{i}"]
        if mixed_precision:
            h = jnp.dot(h.astype(jnp.bfloat16), w.astype(jnp.bfloat16),
                        preferred_element_type=jnp.float32)
        else:
            h = jnp.dot(h, w)
        h = h + raw_params[f"b{i}"]
        h = jnp.maximum(h, 0.0)
        mu = jnp.mean(h, axis=-1, keepdims=True)
        var = jnp.mean((h - mu) ** 2, axis=-1, keepdims=True)
        h = (h - mu) / jnp.sqrt(var + LN_EPS)
        h = h * raw_params[f"g{i}"] + raw_params[f"be{i}"]
    return h @ raw_params["w5"] + raw_params["b5"]


def folded_reference(state, fused_params):
    """f32 forward on folded params (mirrors the kernel math, no Pallas)."""
    h = state
    for i in range(1, 5):
        h = h @ fused_params[f"w{i}"].astype(jnp.float32) + fused_params[f"b{i}"]
        h = jnp.maximum(h, 0.0)
        mu = jnp.mean(h, axis=-1, keepdims=True)
        var = jnp.mean((h - mu) ** 2, axis=-1, keepdims=True)
        h = (h - mu) / jnp.sqrt(var + LN_EPS)
    w5 = fused_params["w5"].astype(jnp.float32)
    return jnp.sum(h * w5, axis=-1, keepdims=True) + fused_params["b5"]


if __name__ == "__main__":
    STATE_DIM = 8
    key = jax.random.PRNGKey(0)
    k_params, k_state, k_aff = jax.random.split(key, 3)
    raw = init_params(k_params, STATE_DIM)
    fused = prepare_params(raw)

    # Pure-JAX check of the gamma/beta -> next-layer fold with non-trivial
    # affine params (f32 end-to-end, tight tolerance; no bf16 involved).
    raw_pert = dict(raw)
    kg = jax.random.split(k_aff, 8)
    for i in range(1, 5):
        fo = raw[f"g{i}"].shape[-1]
        raw_pert[f"g{i}"] = 1.0 + 0.3 * jax.random.normal(kg[2 * i - 2], (1, fo))
        raw_pert[f"be{i}"] = 0.3 * jax.random.normal(kg[2 * i - 1], (1, fo))
    probe = jax.random.normal(jax.random.PRNGKey(7), (16, STATE_DIM), jnp.float32)
    fold_ref = reference_forward(probe, raw_pert, mixed_precision=False)
    fold_out = folded_reference(
        probe, prepare_params(raw_pert, cast_matmul_to_bf16=False))
    assert jnp.allclose(fold_out, fold_ref, atol=1e-4, rtol=1e-4)

    # Small batch (B=2) -- single padded tile through the Pallas kernel.
    state = jax.random.normal(k_state, (2, STATE_DIM), dtype=jnp.float32)
    out = jax.block_until_ready(value_network_forward(state, fused))
    ref = reference_forward(state, raw)
    assert out.shape == (2, 1)
    assert jnp.allclose(out, ref, atol=2e-3, rtol=2e-3), (out, ref)

    # Ragged larger batch -- exercises the >=2-step "parallel" grid (megacore
    # split on v7x) plus tail padding / slicing.
    state2 = jax.random.normal(jax.random.PRNGKey(1), (300, STATE_DIM),
                               dtype=jnp.float32)
    out2 = jax.block_until_ready(value_network_forward(state2, fused))
    ref2 = reference_forward(state2, raw)
    assert out2.shape == (300, 1)
    assert jnp.allclose(out2, ref2, atol=2e-3, rtol=2e-3)

    print("KERNEL_OK")
</pallas_src>

<mosaic_0001>
module attributes {stable_mosaic.version = 11 : i64} {
  func.func @value_net_kernel(%arg0: i32, %arg1: memref<16x8xf32, #tpu.memory_space<vmem>>, %arg2: memref<8x512xbf16, #tpu.memory_space<vmem>>, %arg3: memref<1x512xf32, #tpu.memory_space<vmem>>, %arg4: memref<512x512xbf16, #tpu.memory_space<vmem>>, %arg5: memref<1x512xf32, #tpu.memory_space<vmem>>, %arg6: memref<512x256xbf16, #tpu.memory_space<vmem>>, %arg7: memref<1x256xf32, #tpu.memory_space<vmem>>, %arg8: memref<256x256xbf16, #tpu.memory_space<vmem>>, %arg9: memref<1x256xf32, #tpu.memory_space<vmem>>, %arg10: memref<1x256xf32, #tpu.memory_space<vmem>>, %arg11: memref<1x1xf32, #tpu.memory_space<vmem>>, %arg12: memref<16x1xf32, #tpu.memory_space<vmem>>) attributes {dimension_semantics = [#tpu.dimension_semantics<parallel>], iteration_bounds = array<i64: 1>, scalar_prefetch = 0 : i64, scratch_operands = 0 : i64, tpu.core_type = #tpu.core_type<tc>, window_params = [{transform_indices = @transform_0, window_bounds = array<i64: 16, 8>}, {pipeline_mode = #tpu.pipeline_mode<synchronous>, transform_indices = @transform_1, window_bounds = array<i64: 8, 512>}, {pipeline_mode = #tpu.pipeline_mode<synchronous>, transform_indices = @transform_2, window_bounds = array<i64: 1, 512>}, {pipeline_mode = #tpu.pipeline_mode<synchronous>, transform_indices = @transform_3, window_bounds = array<i64: 512, 512>}, {pipeline_mode = #tpu.pipeline_mode<synchronous>, transform_indices = @transform_4, window_bounds = array<i64: 1, 512>}, {pipeline_mode = #tpu.pipeline_mode<synchronous>, transform_indices = @transform_5, window_bounds = array<i64: 512, 256>}, {pipeline_mode = #tpu.pipeline_mode<synchronous>, transform_indices = @transform_6, window_bounds = array<i64: 1, 256>}, {pipeline_mode = #tpu.pipeline_mode<synchronous>, transform_indices = @transform_7, window_bounds = array<i64: 256, 256>}, {pipeline_mode = #tpu.pipeline_mode<synchronous>, transform_indices = @transform_8, window_bounds = array<i64: 1, 256>}, {pipeline_mode = #tpu.pipeline_mode<synchronous>, transform_indices = @transform_9, window_bounds = array<i64: 1, 256>}, {pipeline_mode = #tpu.pipeline_mode<synchronous>, transform_indices = @transform_10, window_bounds = array<i64: 1, 1>}, {transform_indices = @transform_11, window_bounds = array<i64: 16, 1>}]} {
    %c0 = arith.constant 0 : index
    %c0_0 = arith.constant 0 : index
    %0 = vector.load %arg1[%c0, %c0_0] : memref<16x8xf32, #tpu.memory_space<vmem>>, vector<16x8xf32>
    %1 = arith.truncf %0 : vector<16x8xf32> to vector<16x8xbf16>
    %c0_1 = arith.constant 0 : index
    %c0_2 = arith.constant 0 : index
    %2 = vector.load %arg2[%c0_1, %c0_2] : memref<8x512xbf16, #tpu.memory_space<vmem>>, vector<8x512xbf16>
    %cst = arith.constant dense<0.000000e+00> : vector<16x512xf32>
    %3 = tpu.matmul %1, %2, %cst {dimension_numbers = #tpu.dot_dimension_numbers<[1], [0], [0], [1], [0, 0, 1, 1], [], []>} : vector<16x8xbf16>, vector<8x512xbf16>, vector<16x512xf32> -> vector<16x512xf32>
    %c0_3 = arith.constant 0 : index
    %c0_4 = arith.constant 0 : index
    %4 = vector.load %arg3[%c0_3, %c0_4] : memref<1x512xf32, #tpu.memory_space<vmem>>, vector<1x512xf32>
    %5 = vector.broadcast %4 : vector<1x512xf32> to vector<16x512xf32>
    %6 = arith.addf %3, %5 : vector<16x512xf32>
    %cst_5 = arith.constant 0.000000e+00 : f32
    %7 = vector.broadcast %cst_5 : f32 to vector<16x512xf32>
    %8 = arith.maximumf %6, %7 : vector<16x512xf32>
    %cst_6 = arith.constant dense<0.000000e+00> : vector<16xf32>
    %9 = vector.multi_reduction <add>, %8, %cst_6 [1] : vector<16x512xf32> to vector<16xf32>
    %10 = vector.shape_cast %9 : vector<16xf32> to vector<16x1xf32>
    %11 = arith.mulf %8, %8 : vector<16x512xf32>
    %cst_7 = arith.constant dense<0.000000e+00> : vector<16xf32>
    %12 = vector.multi_reduction <add>, %11, %cst_7 [1] : vector<16x512xf32> to vector<16xf32>
    %13 = vector.shape_cast %12 : vector<16xf32> to vector<16x1xf32>
    %cst_8 = arith.constant 0.001953125 : f32
    %14 = vector.broadcast %cst_8 : f32 to vector<16x1xf32>
    %15 = arith.mulf %10, %14 : vector<16x1xf32>
    %cst_9 = arith.constant 0.001953125 : f32
    %16 = vector.broadcast %cst_9 : f32 to vector<16x1xf32>
    %17 = arith.mulf %13, %16 : vector<16x1xf32>
    %18 = arith.mulf %15, %15 : vector<16x1xf32>
    %19 = arith.subf %17, %18 : vector<16x1xf32>
    %cst_10 = arith.constant 0.000000e+00 : f32
    %20 = vector.broadcast %cst_10 : f32 to vector<16x1xf32>
    %21 = arith.maximumf %19, %20 : vector<16x1xf32>
    %22 = vector.broadcast %15 : vector<16x1xf32> to vector<16x512xf32>
    %23 = arith.subf %8, %22 : vector<16x512xf32>
    %cst_11 = arith.constant 9.99999974E-6 : f32
    %24 = vector.broadcast %cst_11 : f32 to vector<16x1xf32>
    %25 = arith.addf %21, %24 : vector<16x1xf32>
    %26 = math.rsqrt %25 : vector<16x1xf32>
    %27 = vector.broadcast %26 : vector<16x1xf32> to vector<16x512xf32>
    %28 = arith.mulf %23, %27 : vector<16x512xf32>
    %29 = arith.truncf %28 : vector<16x512xf32> to vector<16x512xbf16>
    %c0_12 = arith.constant 0 : index
    %c0_13 = arith.constant 0 : index
    %30 = vector.load %arg4[%c0_12, %c0_13] : memref<512x512xbf16, #tpu.memory_space<vmem>>, vector<512x512xbf16>
    %cst_14 = arith.constant dense<0.000000e+00> : vector<16x512xf32>
    %31 = tpu.matmul %29, %30, %cst_14 {dimension_numbers = #tpu.dot_dimension_numbers<[1], [0], [0], [1], [0, 0, 1, 1], [], []>} : vector<16x512xbf16>, vector<512x512xbf16>, vector<16x512xf32> -> vector<16x512xf32>
    %c0_15 = arith.constant 0 : index
    %c0_16 = arith.constant 0 : index
    %32 = vector.load %arg5[%c0_15, %c0_16] : memref<1x512xf32, #tpu.memory_space<vmem>>, vector<1x512xf32>
    %33 = vector.broadcast %32 : vector<1x512xf32> to vector<16x512xf32>
    %34 = arith.addf %31, %33 : vector<16x512xf32>
    %cst_17 = arith.constant 0.000000e+00 : f32
    %35 = vector.broadcast %cst_17 : f32 to vector<16x512xf32>
    %36 = arith.maximumf %34, %35 : vector<16x512xf32>
    %cst_18 = arith.constant dense<0.000000e+00> : vector<16xf32>
    %37 = vector.multi_reduction <add>, %36, %cst_18 [1] : vector<16x512xf32> to vector<16xf32>
    %38 = vector.shape_cast %37 : vector<16xf32> to vector<16x1xf32>
    %39 = arith.mulf %36, %36 : vector<16x512xf32>
    %cst_19 = arith.constant dense<0.000000e+00> : vector<16xf32>
    %40 = vector.multi_reduction <add>, %39, %cst_19 [1] : vector<16x512xf32> to vector<16xf32>
    %41 = vector.shape_cast %40 : vector<16xf32> to vector<16x1xf32>
    %cst_20 = arith.constant 0.001953125 : f32
    %42 = vector.broadcast %cst_20 : f32 to vector<16x1xf32>
    %43 = arith.mulf %38, %42 : vector<16x1xf32>
    %cst_21 = arith.constant 0.001953125 : f32
    %44 = vector.broadcast %cst_21 : f32 to vector<16x1xf32>
    %45 = arith.mulf %41, %44 : vector<16x1xf32>
    %46 = arith.mulf %43, %43 : vector<16x1xf32>
    %47 = arith.subf %45, %46 : vector<16x1xf32>
    %cst_22 = arith.constant 0.000000e+00 : f32
    %48 = vector.broadcast %cst_22 : f32 to vector<16x1xf32>
    %49 = arith.maximumf %47, %48 : vector<16x1xf32>
    %50 = vector.broadcast %43 : vector<16x1xf32> to vector<16x512xf32>
    %51 = arith.subf %36, %50 : vector<16x512xf32>
    %cst_23 = arith.constant 9.99999974E-6 : f32
    %52 = vector.broadcast %cst_23 : f32 to vector<16x1xf32>
    %53 = arith.addf %49, %52 : vector<16x1xf32>
    %54 = math.rsqrt %53 : vector<16x1xf32>
    %55 = vector.broadcast %54 : vector<16x1xf32> to vector<16x512xf32>
    %56 = arith.mulf %51, %55 : vector<16x512xf32>
    %57 = arith.truncf %56 : vector<16x512xf32> to vector<16x512xbf16>
    %c0_24 = arith.constant 0 : index
    %c0_25 = arith.constant 0 : index
    %58 = vector.load %arg6[%c0_24, %c0_25] : memref<512x256xbf16, #tpu.memory_space<vmem>>, vector<512x256xbf16>
    %cst_26 = arith.constant dense<0.000000e+00> : vector<16x256xf32>
    %59 = tpu.matmul %57, %58, %cst_26 {dimension_numbers = #tpu.dot_dimension_numbers<[1], [0], [0], [1], [0, 0, 1, 1], [], []>} : vector<16x512xbf16>, vector<512x256xbf16>, vector<16x256xf32> -> vector<16x256xf32>
    %c0_27 = arith.constant 0 : index
    %c0_28 = arith.constant 0 : index
    %60 = vector.load %arg7[%c0_27, %c0_28] : memref<1x256xf32, #tpu.memory_space<vmem>>, vector<1x256xf32>
    %61 = vector.broadcast %60 : vector<1x256xf32> to vector<16x256xf32>
    %62 = arith.addf %59, %61 : vector<16x256xf32>
    %cst_29 = arith.constant 0.000000e+00 : f32
    %63 = vector.broadcast %cst_29 : f32 to vector<16x256xf32>
    %64 = arith.maximumf %62, %63 : vector<16x256xf32>
    %cst_30 = arith.constant dense<0.000000e+00> : vector<16xf32>
    %65 = vector.multi_reduction <add>, %64, %cst_30 [1] : vector<16x256xf32> to vector<16xf32>
    %66 = vector.shape_cast %65 : vector<16xf32> to vector<16x1xf32>
    %67 = arith.mulf %64, %64 : vector<16x256xf32>
    %cst_31 = arith.constant dense<0.000000e+00> : vector<16xf32>
    %68 = vector.multi_reduction <add>, %67, %cst_31 [1] : vector<16x256xf32> to vector<16xf32>
    %69 = vector.shape_cast %68 : vector<16xf32> to vector<16x1xf32>
    %cst_32 = arith.constant 3.906250e-03 : f32
    %70 = vector.broadcast %cst_32 : f32 to vector<16x1xf32>
    %71 = arith.mulf %66, %70 : vector<16x1xf32>
    %cst_33 = arith.constant 3.906250e-03 : f32
    %72 = vector.broadcast %cst_33 : f32 to vector<16x1xf32>
    %73 = arith.mulf %69, %72 : vector<16x1xf32>
    %74 = arith.mulf %71, %71 : vector<16x1xf32>
    %75 = arith.subf %73, %74 : vector<16x1xf32>
    %cst_34 = arith.constant 0.000000e+00 : f32
    %76 = vector.broadcast %cst_34 : f32 to vector<16x1xf32>
    %77 = arith.maximumf %75, %76 : vector<16x1xf32>
    %78 = vector.broadcast %71 : vector<16x1xf32> to vector<16x256xf32>
    %79 = arith.subf %64, %78 : vector<16x256xf32>
    %cst_35 = arith.constant 9.99999974E-6 : f32
    %80 = vector.broadcast %cst_35 : f32 to vector<16x1xf32>
    %81 = arith.addf %77, %80 : vector<16x1xf32>
    %82 = math.rsqrt %81 : vector<16x1xf32>
    %83 = vector.broadcast %82 : vector<16x1xf32> to vector<16x256xf32>
    %84 = arith.mulf %79, %83 : vector<16x256xf32>
    %85 = arith.truncf %84 : vector<16x256xf32> to vector<16x256xbf16>
    %c0_36 = arith.constant 0 : index
    %c0_37 = arith.constant 0 : index
    %86 = vector.load %arg8[%c0_36, %c0_37] : memref<256x256xbf16, #tpu.memory_space<vmem>>, vector<256x256xbf16>
    %cst_38 = arith.constant dense<0.000000e+00> : vector<16x256xf32>
    %87 = tpu.matmul %85, %86, %cst_38 {dimension_numbers = #tpu.dot_dimension_numbers<[1], [0], [0], [1], [0, 0, 1, 1], [], []>} : vector<16x256xbf16>, vector<256x256xbf16>, vector<16x256xf32> -> vector<16x256xf32>
    %c0_39 = arith.constant 0 : index
    %c0_40 = arith.constant 0 : index
    %88 = vector.load %arg9[%c0_39, %c0_40] : memref<1x256xf32, #tpu.memory_space<vmem>>, vector<1x256xf32>
    %89 = vector.broadcast %88 : vector<1x256xf32> to vector<16x256xf32>
    %90 = arith.addf %87, %89 : vector<16x256xf32>
    %cst_41 = arith.constant 0.000000e+00 : f32
    %91 = vector.broadcast %cst_41 : f32 to vector<16x256xf32>
    %92 = arith.maximumf %90, %91 : vector<16x256xf32>
    %cst_42 = arith.constant dense<0.000000e+00> : vector<16xf32>
    %93 = vector.multi_reduction <add>, %92, %cst_42 [1] : vector<16x256xf32> to vector<16xf32>
    %94 = vector.shape_cast %93 : vector<16xf32> to vector<16x1xf32>
    %95 = arith.mulf %92, %92 : vector<16x256xf32>
    %cst_43 = arith.constant dense<0.000000e+00> : vector<16xf32>
    %96 = vector.multi_reduction <add>, %95, %cst_43 [1] : vector<16x256xf32> to vector<16xf32>
    %97 = vector.shape_cast %96 : vector<16xf32> to vector<16x1xf32>
    %cst_44 = arith.constant 3.906250e-03 : f32
    %98 = vector.broadcast %cst_44 : f32 to vector<16x1xf32>
    %99 = arith.mulf %94, %98 : vector<16x1xf32>
    %cst_45 = arith.constant 3.906250e-03 : f32
    %100 = vector.broadcast %cst_45 : f32 to vector<16x1xf32>
    %101 = arith.mulf %97, %100 : vector<16x1xf32>
    %102 = arith.mulf %99, %99 : vector<16x1xf32>
    %103 = arith.subf %101, %102 : vector<16x1xf32>
    %cst_46 = arith.constant 0.000000e+00 : f32
    %104 = vector.broadcast %cst_46 : f32 to vector<16x1xf32>
    %105 = arith.maximumf %103, %104 : vector<16x1xf32>
    %106 = vector.broadcast %99 : vector<16x1xf32> to vector<16x256xf32>
    %107 = arith.subf %92, %106 : vector<16x256xf32>
    %cst_47 = arith.constant 9.99999974E-6 : f32
    %108 = vector.broadcast %cst_47 : f32 to vector<16x1xf32>
    %109 = arith.addf %105, %108 : vector<16x1xf32>
    %110 = math.rsqrt %109 : vector<16x1xf32>
    %111 = vector.broadcast %110 : vector<16x1xf32> to vector<16x256xf32>
    %112 = arith.mulf %107, %111 : vector<16x256xf32>
    %c0_48 = arith.constant 0 : index
    %c0_49 = arith.constant 0 : index
    %113 = vector.load %arg10[%c0_48, %c0_49] : memref<1x256xf32, #tpu.memory_space<vmem>>, vector<1x256xf32>
    %114 = vector.broadcast %113 : vector<1x256xf32> to vector<16x256xf32>
    %115 = arith.mulf %112, %114 : vector<16x256xf32>
    %cst_50 = arith.constant dense<0.000000e+00> : vector<16xf32>
    %116 = vector.multi_reduction <add>, %115, %cst_50 [1] : vector<16x256xf32> to vector<16xf32>
    %117 = vector.shape_cast %116 : vector<16xf32> to vector<16x1xf32>
    %c0_51 = arith.constant 0 : index
    %c0_52 = arith.constant 0 : index
    %118 = vector.load %arg11[%c0_51, %c0_52] : memref<1x1xf32, #tpu.memory_space<vmem>>, vector<1x1xf32>
    %119 = vector.broadcast %118 : vector<1x1xf32> to vector<16x1xf32>
    %120 = arith.addf %117, %119 : vector<16x1xf32>
    %c0_53 = arith.constant 0 : index
    %c0_54 = arith.constant 0 : index
    %121 = vector.load %arg12[%c0_53, %c0_54] : memref<16x1xf32, #tpu.memory_space<vmem>>, vector<16x1xf32>
    tpu.vector_store %arg12[%c0_53, %c0_54], %120 {strides = array<i32>} : memref<16x1xf32, #tpu.memory_space<vmem>>, vector<16x1xf32>,
    return
  }
  func.func @transform_0(%arg0: i32) -> (i32, i32) {
    %c0_i32 = arith.constant 0 : i32
    %c0_i32_0 = arith.constant 0 : i32
    return %arg0, %c0_i32 : i32, i32
  }
  func.func @transform_1(%arg0: i32) -> (i32, i32) {
    %c0_i32 = arith.constant 0 : i32
    %c0_i32_0 = arith.constant 0 : i32
    %c0_i32_1 = arith.constant 0 : i32
    return %c0_i32, %c0_i32_0 : i32, i32
  }
  func.func @transform_2(%arg0: i32) -> (i32, i32) {
    %c0_i32 = arith.constant 0 : i32
    %c0_i32_0 = arith.constant 0 : i32
    %c0_i32_1 = arith.constant 0 : i32
    return %c0_i32, %c0_i32_0 : i32, i32
  }
  func.func @transform_3(%arg0: i32) -> (i32, i32) {
    %c0_i32 = arith.constant 0 : i32
    %c0_i32_0 = arith.constant 0 : i32
    %c0_i32_1 = arith.constant 0 : i32
    return %c0_i32, %c0_i32_0 : i32, i32
  }
  func.func @transform_4(%arg0: i32) -> (i32, i32) {
    %c0_i32 = arith.constant 0 : i32
    %c0_i32_0 = arith.constant 0 : i32
    %c0_i32_1 = arith.constant 0 : i32
    return %c0_i32, %c0_i32_0 : i32, i32
  }
  func.func @transform_5(%arg0: i32) -> (i32, i32) {
    %c0_i32 = arith.constant 0 : i32
    %c0_i32_0 = arith.constant 0 : i32
    %c0_i32_1 = arith.constant 0 : i32
    return %c0_i32, %c0_i32_0 : i32, i32
  }
  func.func @transform_6(%arg0: i32) -> (i32, i32) {
    %c0_i32 = arith.constant 0 : i32
    %c0_i32_0 = arith.constant 0 : i32
    %c0_i32_1 = arith.constant 0 : i32
    return %c0_i32, %c0_i32_0 : i32, i32
  }
  func.func @transform_7(%arg0: i32) -> (i32, i32) {
    %c0_i32 = arith.constant 0 : i32
    %c0_i32_0 = arith.constant 0 : i32
    %c0_i32_1 = arith.constant 0 : i32
    return %c0_i32, %c0_i32_0 : i32, i32
  }
  func.func @transform_8(%arg0: i32) -> (i32, i32) {
    %c0_i32 = arith.constant 0 : i32
    %c0_i32_0 = arith.constant 0 : i32
    %c0_i32_1 = arith.constant 0 : i32
    return %c0_i32, %c0_i32_0 : i32, i32
  }
  func.func @transform_9(%arg0: i32) -> (i32, i32) {
    %c0_i32 = arith.constant 0 : i32
    %c0_i32_0 = arith.constant 0 : i32
    %c0_i32_1 = arith.constant 0 : i32
    return %c0_i32, %c0_i32_0 : i32, i32
  }
  func.func @transform_10(%arg0: i32) -> (i32, i32) {
    %c0_i32 = arith.constant 0 : i32
    %c0_i32_0 = arith.constant 0 : i32
    %c0_i32_1 = arith.constant 0 : i32
    return %c0_i32, %c0_i32_0 : i32, i32
  }
  func.func @transform_11(%arg0: i32) -> (i32, i32) {
    %c0_i32 = arith.constant 0 : i32
    %c0_i32_0 = arith.constant 0 : i32
    return %arg0, %c0_i32 : i32, i32
  }
}

</mosaic_0001>

<llo_original>
// kernel: tpu_custom_call.1
$region0: #{tpu_custom_call.1}
  #allocation0 [shape = 'u32[]', space=smem, size = 0x4, offset = 0x4, fixed_abs, tag = 'smem constant byte address 0x4 - core index']
  #allocation1 [shape = 'u32[144,128]{1,0:T(1,128)}', space=vmem, size = 0x12000, scoped, tag = 'internal scratch']
  #allocation2 [shape = 'f32[1,1]{1,0:T(1,128)S(1)}', space=vmem, size = 0x200, scoped, tag = 'scoped memory for tpu_custom_call.1']
  %s0 = inlined_call_operand.vmem [shape: f32[16,8], index: 0, kind: input, shape index: {}]
  %s1 = inlined_call_operand.vmem [shape: bf16[8,512], index: 1, kind: input, shape index: {}]
  %s2 = inlined_call_operand.vmem [shape: f32[1,512], index: 2, kind: input, shape index: {}]
  %s3 = inlined_call_operand.hbm [shape: bf16[512,512], index: 3, kind: input, shape index: {}]
  %s4 = inlined_call_operand.vmem [shape: f32[1,512], index: 4, kind: input, shape index: {}]
  %s5 = inlined_call_operand.hbm [shape: bf16[512,256], index: 5, kind: input, shape index: {}]
  %s6 = inlined_call_operand.vmem [shape: f32[1,256], index: 6, kind: input, shape index: {}]
  %s7 = inlined_call_operand.hbm [shape: bf16[256,256], index: 7, kind: input, shape index: {}]
  %s8 = inlined_call_operand.vmem [shape: f32[1,256], index: 8, kind: input, shape index: {}]
  %s9 = inlined_call_operand.vmem [shape: f32[1,256], index: 9, kind: input, shape index: {}]
  %s10 = inlined_call_operand.<no memory space> [shape: f32[1,1], index: 10, kind: input, shape index: {}]
  %s11 = inlined_call_operand.vmem [shape: f32[16,1], index: 11, kind: output, shape index: {}]
  %s12 = sld [smem:[#allocation0]]
  $region66: #{tpu_custom_call.1} parent=0
    _
  %s14 = ssub.s32 1, %s12
  %s15 = scalar_select 0, %s14, %s12
  %v16 = vstv %s10
  %17 = vst [vmem:[#allocation2] sm:$0x1] %v16
  $region1: #{tpu_custom_call.1} parent=0
    #allocation3 [shape = 'u8[524288]{0}', space=vmem, size = 0x80000, scoped, tag = 'input window, operand 3, single buffered']
    #allocation4 [shape = 's32[1]{0}', space=sflag, size = 0x4, scoped, tag = 'scoped memory for tpu_custom_call.1']
    #allocation5 [shape = 'u8[262144]{0}', space=vmem, size = 0x40000, scoped, tag = 'input window, operand 5, single buffered']
    #allocation6 [shape = 's32[1]{0}', space=sflag, size = 0x4, scoped, tag = 'scoped memory for tpu_custom_call.1']
    #allocation7 [shape = 'u8[131072]{0}', space=vmem, size = 0x20000, scoped, tag = 'input window, operand 7, single buffered']
    %18 = vsyncpa [#allocation4], 0
    %19 = vsyncpa [#allocation6], 0
    // Predicated region
    $region2: #{tpu_custom_call.1} parent=1 // pred_check
      _
    $region3: #{tpu_custom_call.1} parent=1 // pred_check_branch
      %21 = sbr.rel (0) target = $region5
    $region4: #{tpu_custom_call.1} parent=1 // pred_region
      _
    $region5: #{tpu_custom_call.1} parent=1 // pred_fallthru
      _
    // Predicated region
    $region6: #{tpu_custom_call.1} parent=1 // pred_check
      _
    $region7: #{tpu_custom_call.1} parent=1 // pred_check_branch
      %23 = sbr.rel (0) target = $region9
    $region8: #{tpu_custom_call.1} parent=1 // pred_region
      _
    $region9: #{tpu_custom_call.1} parent=1 // pred_fallthru
      _
    // Predicated region
    $region10: #{tpu_custom_call.1} parent=1 // pred_check
      _
    $region11: #{tpu_custom_call.1} parent=1 // pred_check_branch
      %25 = sbr.rel (0) target = $region13
    $region12: #{tpu_custom_call.1} parent=1 // pred_region
      _
    $region13: #{tpu_custom_call.1} parent=1 // pred_fallthru
      _
    // Predicated region
    $region14: #{tpu_custom_call.1} parent=1 // pred_check
      _
    $region15: #{tpu_custom_call.1} parent=1 // pred_check_branch
      %27 = sbr.rel (0) target = $region17
    $region16: #{tpu_custom_call.1} parent=1 // pred_region
      %s29 = ssub.s32 16384, 16384
      %30 = vsyncadd [#allocation4], %s29
      %s31 = sshll.u32 [#allocation3], 4
      %s32 = int_to_ptr.vmem [resolvable:$true] %s31
      %37 = dma.hbm_to_vmem [thread:$0]  %s3, 16384, %s32, [#allocation4], 256, 256, 16
    $region17: #{tpu_custom_call.1} parent=1 // pred_fallthru
      _
    // Predicated region
    $region18: #{tpu_custom_call.1} parent=1 // pred_check
      _
    $region19: #{tpu_custom_call.1} parent=1 // pred_check_branch
      %39 = sbr.rel (0) target = $region21
    $region20: #{tpu_custom_call.1} parent=1 // pred_region
      _
    $region21: #{tpu_custom_call.1} parent=1 // pred_fallthru
      _
    // Predicated region
    $region22: #{tpu_custom_call.1} parent=1 // pred_check
      _
    $region23: #{tpu_custom_call.1} parent=1 // pred_check_branch
      %41 = sbr.rel (0) target = $region25
    $region24: #{tpu_custom_call.1} parent=1 // pred_region
      %s43 = ssub.s32 8192, 8192
      %44 = vsyncadd [#allocation6], %s43
      %s45 = sshll.u32 [#allocation5], 4
      %s46 = int_to_ptr.vmem [resolvable:$true] %s45
      %51 = dma.hbm_to_vmem [thread:$0]  %s5, 8192, %s46, [#allocation6], 128, 128, 8
    $region25: #{tpu_custom_call.1} parent=1 // pred_fallthru
      _
    // Predicated region
    $region26: #{tpu_custom_call.1} parent=1 // pred_check
      _
    $region27: #{tpu_custom_call.1} parent=1 // pred_check_branch
      %53 = sbr.rel (0) target = $region29
    $region28: #{tpu_custom_call.1} parent=1 // pred_region
      _
    $region29: #{tpu_custom_call.1} parent=1 // pred_fallthru
      _
    // Predicated region
    $region30: #{tpu_custom_call.1} parent=1 // pred_check
      _
    $region31: #{tpu_custom_call.1} parent=1 // pred_check_branch
      %55 = sbr.rel (0) target = $region33
    $region32: #{tpu_custom_call.1} parent=1 // pred_region
      %s57 = ssub.s32 4096, 4096
      %58 = vsyncadd [#allocation6], %s57
      %s59 = sshll.u32 [#allocation7], 4
      %s60 = int_to_ptr.vmem [resolvable:$true] %s59
      %65 = dma.hbm_to_vmem [thread:$0]  %s7, 4096, %s60, [#allocation6], 128, 128, 8
    $region33: #{tpu_custom_call.1} parent=1 // pred_fallthru
      _
    // Predicated region
    $region34: #{tpu_custom_call.1} parent=1 // pred_check
      _
    $region35: #{tpu_custom_call.1} parent=1 // pred_check_branch
      %67 = sbr.rel (0) target = $region37
    $region36: #{tpu_custom_call.1} parent=1 // pred_region
      _
    $region37: #{tpu_custom_call.1} parent=1 // pred_fallthru
      _
    // Predicated region
    $region38: #{tpu_custom_call.1} parent=1 // pred_check
      _
    $region39: #{tpu_custom_call.1} parent=1 // pred_check_branch
      %69 = sbr.rel (0) target = $region41
    $region40: #{tpu_custom_call.1} parent=1 // pred_region
      _
    $region41: #{tpu_custom_call.1} parent=1 // pred_fallthru
      _
    // Predicated region
    $region42: #{tpu_custom_call.1} parent=1 // pred_check
      _
    $region43: #{tpu_custom_call.1} parent=1 // pred_check_branch
      %71 = sbr.rel (0) target = $region45
    $region44: #{tpu_custom_call.1} parent=1 // pred_region
      _
    $region45: #{tpu_custom_call.1} parent=1 // pred_fallthru
      _
    // Predicated region
    $region46: #{tpu_custom_call.1} parent=1 // pred_check
      _
    $region47: #{tpu_custom_call.1} parent=1 // pred_check_branch
      %73 = sbr.rel (0) target = $region49
    $region48: #{tpu_custom_call.1} parent=1 // pred_region
      %74 = dma.done [#allocation4], 16384
    $region49: #{tpu_custom_call.1} parent=1 // pred_fallthru
      _
    // Predicated region
    $region50: #{tpu_custom_call.1} parent=1 // pred_check
      _
    $region51: #{tpu_custom_call.1} parent=1 // pred_check_branch
      %76 = sbr.rel (0) target = $region53
    $region52: #{tpu_custom_call.1} parent=1 // pred_region
      %77 = dma.done [#allocation6], 8192
    $region53: #{tpu_custom_call.1} parent=1 // pred_fallthru
      _
    // Predicated region
    $region54: #{tpu_custom_call.1} parent=1 // pred_check
      _
    $region55: #{tpu_custom_call.1} parent=1 // pred_check_branch
      %79 = sbr.rel (0) target = $region57
    $region56: #{tpu_custom_call.1} parent=1 // pred_region
      %80 = dma.done [#allocation6], 4096
    $region57: #{tpu_custom_call.1} parent=1 // pred_fallthru
      _
    %v82 = vld [vmem:[%s0] sm:$0xff]
    %v83 = vld [vmem:[%s0 + $0x8] sm:$0xff]
    %v84 = vpack.c.bf16 %v83, %v82
    %v85 = vld [vmem:[%s1] sm:$0xff]
    %v86 = vld [vmem:[%s1 + $0x8] sm:$0xff]
    %v87 = vld [vmem:[%s2] sm:$0xf]
    %v89 = vlaneseq
    %v90 = vshrl.u32 %v89, 7
    %v91 = vsub.s32 0, %v90
    %v92 = vrot.slane %v87, %v91
    %v93 = vlaneseq
    %v94 = vshrl.u32 %v93, 7
    %v95 = vsub.s32 1, %v94
    %v96 = vrot.slane %v87, %v95
    %v97 = vlaneseq
    %v98 = vshrl.u32 %v97, 7
    %v99 = vsub.s32 2, %v98
    %v100 = vrot.slane %v87, %v99
    %v101 = vlaneseq
    %v102 = vshrl.u32 %v101, 7
    %v103 = vsub.s32 3, %v102
    %v104 = vrot.slane %v87, %v103
    %v111 = vunpack.c.l.b16 %v85
    %v112 = vunpack.c.h.b16 %v85
    %v113 = vunpack.c.l.b16 %v86
    %v114 = vunpack.c.h.b16 %v86
    %v115 = vpack.c.b16 %v111, %v111
    %v116 = vpack.c.b16 %v112, %v112
    %v117 = vpack.c.b16 %v113, %v113
    %v118 = vpack.c.b16 %v114, %v114
    %vm119 = vcmask 64512
    %v121 = vsel %vm119, %v84, 0
    %vm123 = vcmask 1043456
    %v125 = vsel %vm123, %v115, 0
    %v128 = vsel %vm123, %v116, 0
    %v131 = vsel %vm123, %v117, 0
    %v134 = vsel %vm123, %v118, 0
    %136 = vmatprep.subr.bf16.mxu0 0
    %137 = vmatpush1.bf16.msra.mxu0 0
    %138 = vmatprep.subr.bf16.mxu0 0
    %139 = vmatpush1.bf16.msra.mxu0 0
    %140 = vmatprep.subr.bf16.mxu0 0
    %141 = vmatpush1.bf16.msra.mxu0 0
    %142 = vmatprep.subr.bf16.mxu0 0
    %143 = vmatpush1.bf16.msra.mxu0 0
    %144 = vmatprep.subr.bf16.mxu0 0
    %145 = vmatpush1.bf16.msra.mxu0 0
    %146 = vmatprep.subr.bf16.mxu0 0
    %147 = vmatpush1.bf16.msra.mxu0 0
    %148 = vmatprep.subr.bf16.mxu0 0
    %149 = vmatpush1.bf16.msra.mxu0 0
    %150 = vmatprep.subr.bf16.mxu0 %v128
    %151 = vmatpush1.bf16.msra.mxu0 %v125
    %152 = vmatprep.subr.bf16.mxu0 0
    %153 = vmatpush2.bf16.msra.mxu0 0
    %154 = vmatprep.subr.bf16.mxu0 0
    %155 = vmatpush2.bf16.msra.mxu0 0
    %156 = vmatprep.subr.bf16.mxu0 0
    %157 = vmatpush2.bf16.msra.mxu0 0
    %158 = vmatprep.subr.bf16.mxu0 0
    %159 = vmatpush2.bf16.msra.mxu0 0
    %160 = vmatprep.subr.bf16.mxu0 0
    %161 = vmatpush2.bf16.msra.mxu0 0
    %162 = vmatprep.subr.bf16.mxu0 0
    %163 = vmatpush2.bf16.msra.mxu0 0
    %164 = vmatprep.subr.bf16.mxu0 0
    %165 = vmatpush2.bf16.msra.mxu0 0
    %166 = vmatprep.subr.bf16.mxu0 0
    %167 = vmatpush2.bf16.msra.mxu0 0
    %168 = vmatprep.mubr.bf16.mxu0 0
    %169 = vmatmul.mubr.bf16.gmra.mxu0 %v121
    %v170 = vpop.f32.mrf.mxu0
    %v171 = vadd.f32 %v92, %v170
    %v172 = vpop.f32.mrf.mxu0
    %v173 = vadd.f32 %v96, %v172
    %v174 = vpop.f32.mrf.mxu0
    %v175 = vadd.f32 %v92, %v174
    %v176 = vpop.f32.mrf.mxu0
    %v177 = vadd.f32 %v96, %v176
    %178 = vdwg.mxu0
    %179 = vmatprep.subr.bf16.mxu0 0
    %180 = vmatpush1.bf16.msra.mxu0 0
    %181 = vmatprep.subr.bf16.mxu0 0
    %182 = vmatpush1.bf16.msra.mxu0 0
    %183 = vmatprep.subr.bf16.mxu0 0
    %184 = vmatpush1.bf16.msra.mxu0 0
    %185 = vmatprep.subr.bf16.mxu0 0
    %186 = vmatpush1.bf16.msra.mxu0 0
    %187 = vmatprep.subr.bf16.mxu0 0
    %188 = vmatpush1.bf16.msra.mxu0 0
    %189 = vmatprep.subr.bf16.mxu0 0
    %190 = vmatpush1.bf16.msra.mxu0 0
    %191 = vmatprep.subr.bf16.mxu0 0
    %192 = vmatpush1.bf16.msra.mxu0 0
    %193 = vmatprep.subr.bf16.mxu0 %v134
    %194 = vmatpush1.bf16.msra.mxu0 %v131
    %195 = vmatprep.subr.bf16.mxu0 0
    %196 = vmatpush2.bf16.msra.mxu0 0
    %197 = vmatprep.subr.bf16.mxu0 0
    %198 = vmatpush2.bf16.msra.mxu0 0
    %199 = vmatprep.subr.bf16.mxu0 0
    %200 = vmatpush2.bf16.msra.mxu0 0
    %201 = vmatprep.subr.bf16.mxu0 0
    %202 = vmatpush2.bf16.msra.mxu0 0
    %203 = vmatprep.subr.bf16.mxu0 0
    %204 = vmatpush2.bf16.msra.mxu0 0
    %205 = vmatprep.subr.bf16.mxu0 0
    %206 = vmatpush2.bf16.msra.mxu0 0
    %207 = vmatprep.subr.bf16.mxu0 0
    %208 = vmatpush2.bf16.msra.mxu0 0
    %209 = vmatprep.subr.bf16.mxu0 0
    %210 = vmatpush2.bf16.msra.mxu0 0
    %211 = vmatprep.mubr.bf16.mxu0 0
    %212 = vmatmul.mubr.bf16.gmra.mxu0 %v121
    %v213 = vpop.f32.mrf.mxu0
    %v214 = vadd.f32 %v100, %v213
    %v215 = vpop.f32.mrf.mxu0
    %v216 = vadd.f32 %v104, %v215
    %v217 = vpop.f32.mrf.mxu0
    %v218 = vadd.f32 %v100, %v217
    %v219 = vpop.f32.mrf.mxu0
    %v220 = vadd.f32 %v104, %v219
    %221 = vdwg.mxu0
    %v222 = vmax.f32 %v171, 0.0
    %v223 = vmax.f32 %v173, 0.0
    %v224 = vmax.f32 %v214, 0.0
    %v225 = vmax.f32 %v216, 0.0
    %v226 = vmax.f32 %v175, 0.0
    %v227 = vmax.f32 %v177, 0.0
    %v228 = vmax.f32 %v218, 0.0
    %v229 = vmax.f32 %v220, 0.0
    %v230 = vadd.f32 %v222, %v223
    %v231 = vadd.f32 %v230, %v224
    %v232 = vadd.f32 %v231, %v225
    %233 = vadd.xlane.f32.xlu0 %v232
    %v234 = vpop.xlane.xlu0 %233
    %v235 = vadd.f32 %v226, %v227
    %v236 = vadd.f32 %v235, %v228
    %v237 = vadd.f32 %v236, %v229
    %238 = vadd.xlane.f32.xlu0 %v237
    %v239 = vpop.xlane.xlu0 %238
    %v240 = vmul.f32 %v222, %v222
    %v241 = vmul.f32 %v223, %v223
    %v242 = vmul.f32 %v224, %v224
    %v243 = vmul.f32 %v225, %v225
    %v244 = vmul.f32 %v226, %v226
    %v245 = vmul.f32 %v227, %v227
    %v246 = vmul.f32 %v228, %v228
    %v247 = vmul.f32 %v229, %v229
    %v248 = vadd.f32 %v240, %v241
    %v249 = vadd.f32 %v248, %v242
    %v250 = vadd.f32 %v249, %v243
    %251 = vadd.xlane.f32.xlu0 %v250
    %v252 = vpop.xlane.xlu0 %251
    %v253 = vadd.f32 %v244, %v245
    %v254 = vadd.f32 %v253, %v246
    %v255 = vadd.f32 %v254, %v247
    %256 = vadd.xlane.f32.xlu0 %v255
    %v257 = vpop.xlane.xlu0 %256
    %v258 = vmul.f32 %v234, 0.001953125
    %v259 = vmul.f32 %v239, 0.001953125
    %v260 = vmul.f32 %v252, 0.001953125
    %v261 = vmul.f32 %v257, 0.001953125
    %v262 = vmul.f32 %v258, %v258
    %v263 = vmul.f32 %v259, %v259
    %v264 = vsub.f32 %v260, %v262
    %v265 = vsub.f32 %v261, %v263
    %v266 = vmax.f32 %v264, 0.0
    %v267 = vmax.f32 %v265, 0.0
    %v268 = vsub.f32 %v222, %v258
    %v269 = vsub.f32 %v223, %v258
    %v270 = vsub.f32 %v224, %v258
    %v271 = vsub.f32 %v225, %v258
    %v272 = vsub.f32 %v226, %v259
    %v273 = vsub.f32 %v227, %v259
    %v274 = vsub.f32 %v228, %v259
    %v275 = vsub.f32 %v229, %v259
    %v276 = vadd.f32 %v266, 1e-05
    %v277 = vadd.f32 %v267, 1e-05
    %v278 = vrsqrt.pop %v276
    %v279 = vrsqrt.pop %v277
    %v280 = vmul.f32 %v268, %v278
    %v281 = vmul.f32 %v269, %v278
    %v282 = vmul.f32 %v270, %v278
    %v283 = vmul.f32 %v271, %v278
    %v284 = vmul.f32 %v272, %v279
    %v285 = vmul.f32 %v273, %v279
    %v286 = vmul.f32 %v274, %v279
    %v287 = vmul.f32 %v275, %v279
    %v288 = vpack.c.bf16 %v284, %v280
    %v289 = vpack.c.bf16 %v285, %v281
    %v290 = vpack.c.bf16 %v286, %v282
    %v291 = vpack.c.bf16 %v287, %v283
    %v292 = vld [vmem:[#allocation3] sm:$0xff]
    %v293 = vld [vmem:[#allocation3 + $0x8] sm:$0xff]
    %v294 = vld [vmem:[#allocation3 + $0x10] sm:$0xff]
    %v295 = vld [vmem:[#allocation3 + $0x18] sm:$0xff]
    %v296 = vld [vmem:[#allocation3 + $0x20] sm:$0xff]
    %v297 = vld [vmem:[#allocation3 + $0x28] sm:$0xff]
    %v298 = vld [vmem:[#allocation3 + $0x30] sm:$0xff]
    %v299 = vld [vmem:[#allocation3 + $0x38] sm:$0xff]
    %v300 = vld [vmem:[#allocation3 + $0x40] sm:$0xff]
    %v301 = vld [vmem:[#allocation3 + $0x48] sm:$0xff]
    %v302 = vld [vmem:[#allocation3 + $0x50] sm:$0xff]
    %v303 = vld [vmem:[#allocation3 + $0x58] sm:$0xff]
    %v304 = vld [vmem:[#allocation3 + $0x60] sm:$0xff]
    %v305 = vld [vmem:[#allocation3 + $0x68] sm:$0xff]
    %v306 = vld [vmem:[#allocation3 + $0x70] sm:$0xff]
    %v307 = vld [vmem:[#allocation3 + $0x78] sm:$0xff]
    %v308 = vld [vmem:[#allocation3 + $0x80] sm:$0xff]
    %v309 = vld [vmem:[#allocation3 + $0x88] sm:$0xff]
    %v310 = vld [vmem:[#allocation3 + $0x90] sm:$0xff]
    %v311 = vld [vmem:[#allocation3 + $0x98] sm:$0xff]
    %v312 = vld [vmem:[#allocation3 + $0xa0] sm:$0xff]
    %v313 = vld [vmem:[#allocation3 + $0xa8] sm:$0xff]
    %v314 = vld [vmem:[#allocation3 + $0xb0] sm:$0xff]
    %v315 = vld [vmem:[#allocation3 + $0xb8] sm:$0xff]
    %v316 = vld [vmem:[#allocation3 + $0xc0] sm:$0xff]
    %v317 = vld [vmem:[#allocation3 + $0xc8] sm:$0xff]
    %v318 = vld [vmem:[#allocation3 + $0xd0] sm:$0xff]
    %v319 = vld [vmem:[#allocation3 + $0xd8] sm:$0xff]
    %v320 = vld [vmem:[#allocation3 + $0xe0] sm:$0xff]
    %v321 = vld [vmem:[#allocation3 + $0xe8] sm:$0xff]
    %v322 = vld [vmem:[#allocation3 + $0xf0] sm:$0xff]
    %v323 = vld [vmem:[#allocation3 + $0xf8] sm:$0xff]
    %v324 = vld [vmem:[#allocation3 + $0x100] sm:$0xff]
    %v325 = vld [vmem:[#allocation3 + $0x108] sm:$0xff]
    %v326 = vld [vmem:[#allocation3 + $0x110] sm:$0xff]
    %v327 = vld [vmem:[#allocation3 + $0x118] sm:$0xff]
    %v328 = vld [vmem:[#allocation3 + $0x120] sm:$0xff]
    %v329 = vld [vmem:[#allocation3 + $0x128] sm:$0xff]
    %v330 = vld [vmem:[#allocation3 + $0x130] sm:$0xff]
    %v331 = vld [vmem:[#allocation3 + $0x138] sm:$0xff]
    %v332 = vld [vmem:[#allocation3 + $0x140] sm:$0xff]
    %v333 = vld [vmem:[#allocation3 + $0x148] sm:$0xff]
    %v334 = vld [vmem:[#allocation3 + $0x150] sm:$0xff]
    %v335 = vld [vmem:[#allocation3 + $0x158] sm:$0xff]
    %v336 = vld [vmem:[#allocation3 + $0x160] sm:$0xff]
    %v337 = vld [vmem:[#allocation3 + $0x168] sm:$0xff]
    %v338 = vld [vmem:[#allocation3 + $0x170] sm:$0xff]
    %v339 = vld [vmem:[#allocation3 + $0x178] sm:$0xff]
    %v340 = vld [vmem:[#allocation3 + $0x180] sm:$0xff]
    %v341 = vld [vmem:[#allocation3 + $0x188] sm:$0xff]
    %v342 = vld [vmem:[#allocation3 + $0x190] sm:$0xff]
    %v343 = vld [vmem:[#allocation3 + $0x198] sm:$0xff]
    %v344 = vld [vmem:[#allocation3 + $0x1a0] sm:$0xff]
    %v345 = vld [vmem:[#allocation3 + $0x1a8] sm:$0xff]
    %v346 = vld [vmem:[#allocation3 + $0x1b0] sm:$0xff]
    %v347 = vld [vmem:[#allocation3 + $0x1b8] sm:$0xff]
    %v348 = vld [vmem:[#allocation3 + $0x1c0] sm:$0xff]
    %v349 = vld [vmem:[#allocation3 + $0x1c8] sm:$0xff]
    %v350 = vld [vmem:[#allocation3 + $0x1d0] sm:$0xff]
    %v351 = vld [vmem:[#allocation3 + $0x1d8] sm:$0xff]
    %v352 = vld [vmem:[#allocation3 + $0x1e0] sm:$0xff]
    %v353 = vld [vmem:[#allocation3 + $0x1e8] sm:$0xff]
    %v354 = vld [vmem:[#allocation3 + $0x1f0] sm:$0xff]
    %v355 = vld [vmem:[#allocation3 + $0x1f8] sm:$0xff]
    %v356 = vld [vmem:[#allocation3 + $0x200] sm:$0xff]
    %v357 = vld [vmem:[#allocation3 + $0x208] sm:$0xff]
    %v358 = vld [vmem:[#allocation3 + $0x210] sm:$0xff]
    %v359 = vld [vmem:[#allocation3 + $0x218] sm:$0xff]
    %v360 = vld [vmem:[#allocation3 + $0x220] sm:$0xff]
    %v361 = vld [vmem:[#allocation3 + $0x228] sm:$0xff]
    %v362 = vld [vmem:[#allocation3 + $0x230] sm:$0xff]
    %v363 = vld [vmem:[#allocation3 + $0x238] sm:$0xff]
    %v364 = vld [vmem:[#allocation3 + $0x240] sm:$0xff]
    %v365 = vld [vmem:[#allocation3 + $0x248] sm:$0xff]
    %v366 = vld [vmem:[#allocation3 + $0x250] sm:$0xff]
    %v367 = vld [vmem:[#allocation3 + $0x258] sm:$0xff]
    %v368 = vld [vmem:[#allocation3 + $0x260] sm:$0xff]
    %v369 = vld [vmem:[#allocation3 + $0x268] sm:$0xff]
    %v370 = vld [vmem:[#allocation3 + $0x270] sm:$0xff]
    %v371 = vld [vmem:[#allocation3 + $0x278] sm:$0xff]
    %v372 = vld [vmem:[#allocation3 + $0x280] sm:$0xff]
    %v373 = vld [vmem:[#allocation3 + $0x288] sm:$0xff]
    %v374 = vld [vmem:[#allocation3 + $0x290] sm:$0xff]
    %v375 = vld [vmem:[#allocation3 + $0x298] sm:$0xff]
    %v376 = vld [vmem:[#allocation3 + $0x2a0] sm:$0xff]
    %v377 = vld [vmem:[#allocation3 + $0x2a8] sm:$0xff]
    %v378 = vld [vmem:[#allocation3 + $0x2b0] sm:$0xff]
    %v379 = vld [vmem:[#allocation3 + $0x2b8] sm:$0xff]
    %v380 = vld [vmem:[#allocation3 + $0x2c0] sm:$0xff]
    %v381 = vld [vmem:[#allocation3 + $0x2c8] sm:$0xff]
    %v382 = vld [vmem:[#allocation3 + $0x2d0] sm:$0xff]
    %v383 = vld [vmem:[#allocation3 + $0x2d8] sm:$0xff]
    %v384 = vld [vmem:[#allocation3 + $0x2e0] sm:$0xff]
    %v385 = vld [vmem:[#allocation3 + $0x2e8] sm:$0xff]
    %v386 = vld [vmem:[#allocation3 + $0x2f0] sm:$0xff]
    %v387 = vld [vmem:[#allocation3 + $0x2f8] sm:$0xff]
    %v388 = vld [vmem:[#allocation3 + $0x300] sm:$0xff]
    %v389 = vld [vmem:[#allocation3 + $0x308] sm:$0xff]
    %v390 = vld [vmem:[#allocation3 + $0x310] sm:$0xff]
    %v391 = vld [vmem:[#allocation3 + $0x318] sm:$0xff]
    %v392 = vld [vmem:[#allocation3 + $0x320] sm:$0xff]
    %v393 = vld [vmem:[#allocation3 + $0x328] sm:$0xff]
    %v394 = vld [vmem:[#allocation3 + $0x330] sm:$0xff]
    %v395 = vld [vmem:[#allocation3 + $0x338] sm:$0xff]
    %v396 = vld [vmem:[#allocation3 + $0x340] sm:$0xff]
    %v397 = vld [vmem:[#allocation3 + $0x348] sm:$0xff]
    %v398 = vld [vmem:[#allocation3 + $0x350] sm:$0xff]
    %v399 = vld [vmem:[#allocation3 + $0x358] sm:$0xff]
    %v400 = vld [vmem:[#allocation3 + $0x360] sm:$0xff]
    %v401 = vld [vmem:[#allocation3 + $0x368] sm:$0xff]
    %v402 = vld [vmem:[#allocation3 + $0x370] sm:$0xff]
    %v403 = vld [vmem:[#allocation3 + $0x378] sm:$0xff]
    %v404 = vld [vmem:[#allocation3 + $0x380] sm:$0xff]
    %v405 = vld [vmem:[#allocation3 + $0x388] sm:$0xff]
    %v406 = vld [vmem:[#allocation3 + $0x390] sm:$0xff]
    %v407 = vld [vmem:[#allocation3 + $0x398] sm:$0xff]
    %v408 = vld [vmem:[#allocation3 + $0x3a0] sm:$0xff]
    %v409 = vld [vmem:[#allocation3 + $0x3a8] sm:$0xff]
    %v410 = vld [vmem:[#allocation3 + $0x3b0] sm:$0xff]
    %v411 = vld [vmem:[#allocation3 + $0x3b8] sm:$0xff]
    %v412 = vld [vmem:[#allocation3 + $0x3c0] sm:$0xff]
    %v413 = vld [vmem:[#allocation3 + $0x3c8] sm:$0xff]
    %v414 = vld [vmem:[#allocation3 + $0x3d0] sm:$0xff]
    %v415 = vld [vmem:[#allocation3 + $0x3d8] sm:$0xff]
    %v416 = vld [vmem:[#allocation3 + $0x3e0] sm:$0xff]
    %v417 = vld [vmem:[#allocation3 + $0x3e8] sm:$0xff]
    %v418 = vld [vmem:[#allocation3 + $0x3f0] sm:$0xff]
    %v419 = vld [vmem:[#allocation3 + $0x3f8] sm:$0xff]
    %v420 = vld [vmem:[%s4] sm:$0xf]
    %v422 = vlaneseq
    %v423 = vshrl.u32 %v422, 7
    %v424 = vsub.s32 0, %v423
    %v425 = vrot.slane %v420, %v424
    %v426 = vlaneseq
    %v427 = vshrl.u32 %v426, 7
    %v428 = vsub.s32 1, %v427
    %v429 = vrot.slane %v420, %v428
    %v430 = vlaneseq
    %v431 = vshrl.u32 %v430, 7
    %v432 = vsub.s32 2, %v431
    %v433 = vrot.slane %v420, %v432
    %v434 = vlaneseq
    %v435 = vshrl.u32 %v434, 7
    %v436 = vsub.s32 3, %v435
    %v437 = vrot.slane %v420, %v436
    %v570 = vunpack.c.l.b16 %v292
    %v571 = vunpack.c.h.b16 %v292
    %v572 = vunpack.c.l.b16 %v293
    %v573 = vunpack.c.h.b16 %v293
    %v574 = vunpack.c.l.b16 %v294
    %v575 = vunpack.c.h.b16 %v294
    %v576 = vunpack.c.l.b16 %v295
    %v577 = vunpack.c.h.b16 %v295
    %v578 = vunpack.c.l.b16 %v296
    %v579 = vunpack.c.h.b16 %v296
    %v580 = vunpack.c.l.b16 %v297
    %v581 = vunpack.c.h.b16 %v297
    %v582 = vunpack.c.l.b16 %v298
    %v583 = vunpack.c.h.b16 %v298
    %v584 = vunpack.c.l.b16 %v299
    %v585 = vunpack.c.h.b16 %v299
    %v586 = vunpack.c.l.b16 %v300
    %v587 = vunpack.c.h.b16 %v300
    %v588 = vunpack.c.l.b16 %v301
    %v589 = vunpack.c.h.b16 %v301
    %v590 = vunpack.c.l.b16 %v302
    %v591 = vunpack.c.h.b16 %v302
    %v592 = vunpack.c.l.b16 %v303
    %v593 = vunpack.c.h.b16 %v303
    %v594 = vunpack.c.l.b16 %v304
    %v595 = vunpack.c.h.b16 %v304
    %v596 = vunpack.c.l.b16 %v305
    %v597 = vunpack.c.h.b16 %v305
    %v598 = vunpack.c.l.b16 %v306
    %v599 = vunpack.c.h.b16 %v306
    %v600 = vunpack.c.l.b16 %v307
    %v601 = vunpack.c.h.b16 %v307
    %v602 = vunpack.c.l.b16 %v308
    %v603 = vunpack.c.h.b16 %v308
    %v604 = vunpack.c.l.b16 %v309
    %v605 = vunpack.c.h.b16 %v309
    %v606 = vunpack.c.l.b16 %v310
    %v607 = vunpack.c.h.b16 %v310
    %v608 = vunpack.c.l.b16 %v311
    %v609 = vunpack.c.h.b16 %v311
    %v610 = vunpack.c.l.b16 %v312
    %v611 = vunpack.c.h.b16 %v312
    %v612 = vunpack.c.l.b16 %v313
    %v613 = vunpack.c.h.b16 %v313
    %v614 = vunpack.c.l.b16 %v314
    %v615 = vunpack.c.h.b16 %v314
    %v616 = vunpack.c.l.b16 %v315
    %v617 = vunpack.c.h.b16 %v315
    %v618 = vunpack.c.l.b16 %v316
    %v619 = vunpack.c.h.b16 %v316
    %v620 = vunpack.c.l.b16 %v317
    %v621 = vunpack.c.h.b16 %v317
    %v622 = vunpack.c.l.b16 %v318
    %v623 = vunpack.c.h.b16 %v318
    %v624 = vunpack.c.l.b16 %v319
    %v625 = vunpack.c.h.b16 %v319
    %v626 = vunpack.c.l.b16 %v320
    %v627 = vunpack.c.h.b16 %v320
    %v628 = vunpack.c.l.b16 %v321
    %v629 = vunpack.c.h.b16 %v321
    %v630 = vunpack.c.l.b16 %v322
    %v631 = vunpack.c.h.b16 %v322
    %v632 = vunpack.c.l.b16 %v323
    %v633 = vunpack.c.h.b16 %v323
    %v634 = vunpack.c.l.b16 %v324
    %v635 = vunpack.c.h.b16 %v324
    %v636 = vunpack.c.l.b16 %v325
    %v637 = vunpack.c.h.b16 %v325
    %v638 = vunpack.c.l.b16 %v326
    %v639 = vunpack.c.h.b16 %v326
    %v640 = vunpack.c.l.b16 %v327
    %v641 = vunpack.c.h.b16 %v327
    %v642 = vunpack.c.l.b16 %v328
    %v643 = vunpack.c.h.b16 %v328
    %v644 = vunpack.c.l.b16 %v329
    %v645 = vunpack.c.h.b16 %v329
    %v646 = vunpack.c.l.b16 %v330
    %v647 = vunpack.c.h.b16 %v330
    %v648 = vunpack.c.l.b16 %v331
    %v649 = vunpack.c.h.b16 %v331
    %v650 = vunpack.c.l.b16 %v332
    %v651 = vunpack.c.h.b16 %v332
    %v652 = vunpack.c.l.b16 %v333
    %v653 = vunpack.c.h.b16 %v333
    %v654 = vunpack.c.l.b16 %v334
    %v655 = vunpack.c.h.b16 %v334
    %v656 = vunpack.c.l.b16 %v335
    %v657 = vunpack.c.h.b16 %v335
    %v658 = vunpack.c.l.b16 %v336
    %v659 = vunpack.c.h.b16 %v336
    %v660 = vunpack.c.l.b16 %v337
    %v661 = vunpack.c.h.b16 %v337
    %v662 = vunpack.c.l.b16 %v338
    %v663 = vunpack.c.h.b16 %v338
    %v664 = vunpack.c.l.b16 %v339
    %v665 = vunpack.c.h.b16 %v339
    %v666 = vunpack.c.l.b16 %v340
    %v667 = vunpack.c.h.b16 %v340
    %v668 = vunpack.c.l.b16 %v341
    %v669 = vunpack.c.h.b16 %v341
    %v670 = vunpack.c.l.b16 %v342
    %v671 = vunpack.c.h.b16 %v342
    %v672 = vunpack.c.l.b16 %v343
    %v673 = vunpack.c.h.b16 %v343
    %v674 = vunpack.c.l.b16 %v344
    %v675 = vunpack.c.h.b16 %v344
    %v676 = vunpack.c.l.b16 %v345
    %v677 = vunpack.c.h.b16 %v345
    %v678 = vunpack.c.l.b16 %v346
    %v679 = vunpack.c.h.b16 %v346
    %v680 = vunpack.c.l.b16 %v347
    %v681 = vunpack.c.h.b16 %v347
    %v682 = vunpack.c.l.b16 %v348
    %v683 = vunpack.c.h.b16 %v348
    %v684 = vunpack.c.l.b16 %v349
    %v685 = vunpack.c.h.b16 %v349
    %v686 = vunpack.c.l.b16 %v350
    %v687 = vunpack.c.h.b16 %v350
    %v688 = vunpack.c.l.b16 %v351
    %v689 = vunpack.c.h.b16 %v351
    %v690 = vunpack.c.l.b16 %v352
    %v691 = vunpack.c.h.b16 %v352
    %v692 = vunpack.c.l.b16 %v353
    %v693 = vunpack.c.h.b16 %v353
    %v694 = vunpack.c.l.b16 %v354
    %v695 = vunpack.c.h.b16 %v354
    %v696 = vunpack.c.l.b16 %v355
    %v697 = vunpack.c.h.b16 %v355
    %v698 = vunpack.c.l.b16 %v356
    %v699 = vunpack.c.h.b16 %v356
    %v700 = vunpack.c.l.b16 %v357
    %v701 = vunpack.c.h.b16 %v357
    %v702 = vunpack.c.l.b16 %v358
    %v703 = vunpack.c.h.b16 %v358
    %v704 = vunpack.c.l.b16 %v359
    %v705 = vunpack.c.h.b16 %v359
    %v706 = vunpack.c.l.b16 %v360
    %v707 = vunpack.c.h.b16 %v360
    %v708 = vunpack.c.l.b16 %v361
    %v709 = vunpack.c.h.b16 %v361
    %v710 = vunpack.c.l.b16 %v362
    %v711 = vunpack.c.h.b16 %v362
    %v712 = vunpack.c.l.b16 %v363
    %v713 = vunpack.c.h.b16 %v363
    %v714 = vunpack.c.l.b16 %v364
    %v715 = vunpack.c.h.b16 %v364
    %v716 = vunpack.c.l.b16 %v365
    %v717 = vunpack.c.h.b16 %v365
    %v718 = vunpack.c.l.b16 %v366
    %v719 = vunpack.c.h.b16 %v366
    %v720 = vunpack.c.l.b16 %v367
    %v721 = vunpack.c.h.b16 %v367
    %v722 = vunpack.c.l.b16 %v368
    %v723 = vunpack.c.h.b16 %v368
    %v724 = vunpack.c.l.b16 %v369
    %v725 = vunpack.c.h.b16 %v369
    %v726 = vunpack.c.l.b16 %v370
    %v727 = vunpack.c.h.b16 %v370
    %v728 = vunpack.c.l.b16 %v371
    %v729 = vunpack.c.h.b16 %v371
    %v730 = vunpack.c.l.b16 %v372
    %v731 = vunpack.c.h.b16 %v372
    %v732 = vunpack.c.l.b16 %v373
    %v733 = vunpack.c.h.b16 %v373
    %v734 = vunpack.c.l.b16 %v374
    %v735 = vunpack.c.h.b16 %v374
    %v736 = vunpack.c.l.b16 %v375
    %v737 = vunpack.c.h.b16 %v375
    %v738 = vunpack.c.l.b16 %v376
    %v739 = vunpack.c.h.b16 %v376
    %v740 = vunpack.c.l.b16 %v377
    %v741 = vunpack.c.h.b16 %v377
    %v742 = vunpack.c.l.b16 %v378
    %v743 = vunpack.c.h.b16 %v378
    %v744 = vunpack.c.l.b16 %v379
    %v745 = vunpack.c.h.b16 %v379
    %v746 = vunpack.c.l.b16 %v380
    %v747 = vunpack.c.h.b16 %v380
    %v748 = vunpack.c.l.b16 %v381
    %v749 = vunpack.c.h.b16 %v381
    %v750 = vunpack.c.l.b16 %v382
    %v751 = vunpack.c.h.b16 %v382
    %v752 = vunpack.c.l.b16 %v383
    %v753 = vunpack.c.h.b16 %v383
    %v754 = vunpack.c.l.b16 %v384
    %v755 = vunpack.c.h.b16 %v384
    %v756 = vunpack.c.l.b16 %v385
    %v757 = vunpack.c.h.b16 %v385
    %v758 = vunpack.c.l.b16 %v386
    %v759 = vunpack.c.h.b16 %v386
    %v760 = vunpack.c.l.b16 %v387
    %v761 = vunpack.c.h.b16 %v387
    %v762 = vunpack.c.l.b16 %v388
    %v763 = vunpack.c.h.b16 %v388
    %v764 = vunpack.c.l.b16 %v389
    %v765 = vunpack.c.h.b16 %v389
    %v766 = vunpack.c.l.b16 %v390
    %v767 = vunpack.c.h.b16 %v390
    %v768 = vunpack.c.l.b16 %v391
    %v769 = vunpack.c.h.b16 %v391
    %v770 = vunpack.c.l.b16 %v392
    %v771 = vunpack.c.h.b16 %v392
    %v772 = vunpack.c.l.b16 %v393
    %v773 = vunpack.c.h.b16 %v393
    %v774 = vunpack.c.l.b16 %v394
    %v775 = vunpack.c.h.b16 %v394
    %v776 = vunpack.c.l.b16 %v395
    %v777 = vunpack.c.h.b16 %v395
    %v778 = vunpack.c.l.b16 %v396
    %v779 = vunpack.c.h.b16 %v396
    %v780 = vunpack.c.l.b16 %v397
    %v781 = vunpack.c.h.b16 %v397
    %v782 = vunpack.c.l.b16 %v398
    %v783 = vunpack.c.h.b16 %v398
    %v784 = vunpack.c.l.b16 %v399
    %v785 = vunpack.c.h.b16 %v399
    %v786 = vunpack.c.l.b16 %v400
    %v787 = vunpack.c.h.b16 %v400
    %v788 = vunpack.c.l.b16 %v401
    %v789 = vunpack.c.h.b16 %v401
    %v790 = vunpack.c.l.b16 %v402
    %v791 = vunpack.c.h.b16 %v402
    %v792 = vunpack.c.l.b16 %v403
    %v793 = vunpack.c.h.b16 %v403
    %v794 = vunpack.c.l.b16 %v404
    %v795 = vunpack.c.h.b16 %v404
    %v796 = vunpack.c.l.b16 %v405
    %v797 = vunpack.c.h.b16 %v405
    %v798 = vunpack.c.l.b16 %v406
    %v799 = vunpack.c.h.b16 %v406
    %v800 = vunpack.c.l.b16 %v407
    %v801 = vunpack.c.h.b16 %v407
    %v802 = vunpack.c.l.b16 %v408
    %v803 = vunpack.c.h.b16 %v408
    %v804 = vunpack.c.l.b16 %v409
    %v805 = vunpack.c.h.b16 %v409
    %v806 = vunpack.c.l.b16 %v410
    %v807 = vunpack.c.h.b16 %v410
    %v808 = vunpack.c.l.b16 %v411
    %v809 = vunpack.c.h.b16 %v411
    %v810 = vunpack.c.l.b16 %v412
    %v811 = vunpack.c.h.b16 %v412
    %v812 = vunpack.c.l.b16 %v413
    %v813 = vunpack.c.h.b16 %v413
    %v814 = vunpack.c.l.b16 %v414
    %v815 = vunpack.c.h.b16 %v414
    %v816 = vunpack.c.l.b16 %v415
    %v817 = vunpack.c.h.b16 %v415
    %v818 = vunpack.c.l.b16 %v416
    %v819 = vunpack.c.h.b16 %v416
    %v820 = vunpack.c.l.b16 %v417
    %v821 = vunpack.c.h.b16 %v417
    %v822 = vunpack.c.l.b16 %v418
    %v823 = vunpack.c.h.b16 %v418
    %v824 = vunpack.c.l.b16 %v419
    %v825 = vunpack.c.h.b16 %v419
    %v826 = vpack.c.b16 %v574, %v570
    %v827 = vpack.c.b16 %v575, %v571
    %v828 = vpack.c.b16 %v576, %v572
    %v829 = vpack.c.b16 %v577, %v573
    %v830 = vpack.c.b16 %v582, %v578
    %v831 = vpack.c.b16 %v583, %v579
    %v832 = vpack.c.b16 %v584, %v580
    %v833 = vpack.c.b16 %v585, %v581
    %v834 = vpack.c.b16 %v590, %v586
    %v835 = vpack.c.b16 %v591, %v587
    %v836 = vpack.c.b16 %v592, %v588
    %v837 = vpack.c.b16 %v593, %v589
    %v838 = vpack.c.b16 %v598, %v594
    %v839 = vpack.c.b16 %v599, %v595
    %v840 = vpack.c.b16 %v600, %v596
    %v841 = vpack.c.b16 %v601, %v597
    %v842 = vpack.c.b16 %v606, %v602
    %v843 = vpack.c.b16 %v607, %v603
    %v844 = vpack.c.b16 %v608, %v604
    %v845 = vpack.c.b16 %v609, %v605
    %v846 = vpack.c.b16 %v614, %v610
    %v847 = vpack.c.b16 %v615, %v611
    %v848 = vpack.c.b16 %v616, %v612
    %v849 = vpack.c.b16 %v617, %v613
    %v850 = vpack.c.b16 %v622, %v618
    %v851 = vpack.c.b16 %v623, %v619
    %v852 = vpack.c.b16 %v624, %v620
    %v853 = vpack.c.b16 %v625, %v621
    %v854 = vpack.c.b16 %v630, %v626
    %v855 = vpack.c.b16 %v631, %v627
    %v856 = vpack.c.b16 %v632, %v628
    %v857 = vpack.c.b16 %v633, %v629
    %v858 = vpack.c.b16 %v638, %v634
    %v859 = vpack.c.b16 %v639, %v635
    %v860 = vpack.c.b16 %v640, %v636
    %v861 = vpack.c.b16 %v641, %v637
    %v862 = vpack.c.b16 %v646, %v642
    %v863 = vpack.c.b16 %v647, %v643
    %v864 = vpack.c.b16 %v648, %v644
    %v865 = vpack.c.b16 %v649, %v645
    %v866 = vpack.c.b16 %v654, %v650
    %v867 = vpack.c.b16 %v655, %v651
    %v868 = vpack.c.b16 %v656, %v652
    %v869 = vpack.c.b16 %v657, %v653
    %v870 = vpack.c.b16 %v662, %v658
    %v871 = vpack.c.b16 %v663, %v659
    %v872 = vpack.c.b16 %v664, %v660
    %v873 = vpack.c.b16 %v665, %v661
    %v874 = vpack.c.b16 %v670, %v666
    %v875 = vpack.c.b16 %v671, %v667
    %v876 = vpack.c.b16 %v672, %v668
    %v877 = vpack.c.b16 %v673, %v669
    %v878 = vpack.c.b16 %v678, %v674
    %v879 = vpack.c.b16 %v679, %v675
    %v880 = vpack.c.b16 %v680, %v676
    %v881 = vpack.c.b16 %v681, %v677
    %v882 = vpack.c.b16 %v686, %v682
    %v883 = vpack.c.b16 %v687, %v683
    %v884 = vpack.c.b16 %v688, %v684
    %v885 = vpack.c.b16 %v689, %v685
    %v886 = vpack.c.b16 %v694, %v690
    %v887 = vpack.c.b16 %v695, %v691
    %v888 = vpack.c.b16 %v696, %v692
    %v889 = vpack.c.b16 %v697, %v693
    %v890 = vpack.c.b16 %v702, %v698
    %v891 = vpack.c.b16 %v703, %v699
    %v892 = vpack.c.b16 %v704, %v700
    %v893 = vpack.c.b16 %v705, %v701
    %v894 = vpack.c.b16 %v710, %v706
    %v895 = vpack.c.b16 %v711, %v707
    %v896 = vpack.c.b16 %v712, %v708
    %v897 = vpack.c.b16 %v713, %v709
    %v898 = vpack.c.b16 %v718, %v714
    %v899 = vpack.c.b16 %v719, %v715
    %v900 = vpack.c.b16 %v720, %v716
    %v901 = vpack.c.b16 %v721, %v717
    %v902 = vpack.c.b16 %v726, %v722
    %v903 = vpack.c.b16 %v727, %v723
    %v904 = vpack.c.b16 %v728, %v724
    %v905 = vpack.c.b16 %v729, %v725
    %v906 = vpack.c.b16 %v734, %v730
    %v907 = vpack.c.b16 %v735, %v731
    %v908 = vpack.c.b16 %v736, %v732
    %v909 = vpack.c.b16 %v737, %v733
    %v910 = vpack.c.b16 %v742, %v738
    %v911 = vpack.c.b16 %v743, %v739
    %v912 = vpack.c.b16 %v744, %v740
    %v913 = vpack.c.b16 %v745, %v741
    %v914 = vpack.c.b16 %v750, %v746
    %v915 = vpack.c.b16 %v751, %v747
    %v916 = vpack.c.b16 %v752, %v748
    %v917 = vpack.c.b16 %v753, %v749
    %v918 = vpack.c.b16 %v758, %v754
    %v919 = vpack.c.b16 %v759, %v755
    %v920 = vpack.c.b16 %v760, %v756
    %v921 = vpack.c.b16 %v761, %v757
    %v922 = vpack.c.b16 %v766, %v762
    %v923 = vpack.c.b16 %v767, %v763
    %v924 = vpack.c.b16 %v768, %v764
    %v925 = vpack.c.b16 %v769, %v765
    %v926 = vpack.c.b16 %v774, %v770
    %v927 = vpack.c.b16 %v775, %v771
    %v928 = vpack.c.b16 %v776, %v772
    %v929 = vpack.c.b16 %v777, %v773
    %v930 = vpack.c.b16 %v782, %v778
    %v931 = vpack.c.b16 %v783, %v779
    %v932 = vpack.c.b16 %v784, %v780
    %v933 = vpack.c.b16 %v785, %v781
    %v934 = vpack.c.b16 %v790, %v786
    %v935 = vpack.c.b16 %v791, %v787
    %v936 = vpack.c.b16 %v792, %v788
    %v937 = vpack.c.b16 %v793, %v789
    %v938 = vpack.c.b16 %v798, %v794
    %v939 = vpack.c.b16 %v799, %v795
    %v940 = vpack.c.b16 %v800, %v796
    %v941 = vpack.c.b16 %v801, %v797
    %v942 = vpack.c.b16 %v806, %v802
    %v943 = vpack.c.b16 %v807, %v803
    %v944 = vpack.c.b16 %v808, %v804
    %v945 = vpack.c.b16 %v809, %v805
    %v946 = vpack.c.b16 %v814, %v810
    %v947 = vpack.c.b16 %v815, %v811
    %v948 = vpack.c.b16 %v816, %v812
    %v949 = vpack.c.b16 %v817, %v813
    %v950 = vpack.c.b16 %v822, %v818
    %v951 = vpack.c.b16 %v823, %v819
    %v952 = vpack.c.b16 %v824, %v820
    %v953 = vpack.c.b16 %v825, %v821
    %1082 = vmatprep.subr.bf16.mxu0 %v855
    %1083 = vmatpush1.bf16.msra.mxu0 %v854
    %1084 = vmatprep.subr.bf16.mxu0 %v851
    %1085 = vmatpush1.bf16.msra.mxu0 %v850
    %1086 = vmatprep.subr.bf16.mxu0 %v847
    %1087 = vmatpush1.bf16.msra.mxu0 %v846
    %1088 = vmatprep.subr.bf16.mxu0 %v843
    %1089 = vmatpush1.bf16.msra.mxu0 %v842
    %1090 = vmatprep.subr.bf16.mxu0 %v839
    %1091 = vmatpush1.bf16.msra.mxu0 %v838
    %1092 = vmatprep.subr.bf16.mxu0 %v835
    %1093 = vmatpush1.bf16.msra.mxu0 %v834
    %1094 = vmatprep.subr.bf16.mxu0 %v831
    %1095 = vmatpush1.bf16.msra.mxu0 %v830
    %1096 = vmatprep.subr.bf16.mxu0 %v827
    %1097 = vmatpush1.bf16.msra.mxu0 %v826
    %1098 = vmatprep.subr.bf16.mxu0 %v887
    %1099 = vmatpush2.bf16.msra.mxu0 %v886
    %1100 = vmatprep.subr.bf16.mxu0 %v883
    %1101 = vmatpush2.bf16.msra.mxu0 %v882
    %1102 = vmatprep.subr.bf16.mxu0 %v879
    %1103 = vmatpush2.bf16.msra.mxu0 %v878
    %1104 = vmatprep.subr.bf16.mxu0 %v875
    %1105 = vmatpush2.bf16.msra.mxu0 %v874
    %1106 = vmatprep.subr.bf16.mxu0 %v871
    %1107 = vmatpush2.bf16.msra.mxu0 %v870
    %1108 = vmatprep.subr.bf16.mxu0 %v867
    %1109 = vmatpush2.bf16.msra.mxu0 %v866
    %1110 = vmatprep.subr.bf16.mxu0 %v863
    %1111 = vmatpush2.bf16.msra.mxu0 %v862
    %1112 = vmatprep.subr.bf16.mxu0 %v859
    %1113 = vmatpush2.bf16.msra.mxu0 %v858
    %1114 = vmatprep.mubr.bf16.mxu0 %v289
    %1115 = vmatmul.mubr.bf16.gmra.mxu0 %v288
    %v1116 = vpop.f32.mrf.mxu0
    %v1117 = vadd.f32 %v425, %v1116
    %v1118 = vpop.f32.mrf.mxu0
    %v1119 = vadd.f32 %v429, %v1118
    %v1120 = vpop.f32.mrf.mxu0
    %v1121 = vadd.f32 %v425, %v1120
    %v1122 = vpop.f32.mrf.mxu0
    %v1123 = vadd.f32 %v429, %v1122
    %1124 = vdwg.mxu0
    %1125 = vmatprep.subr.bf16.mxu0 %v919
    %1126 = vmatpush1.bf16.msra.mxu0 %v918
    %1127 = vmatprep.subr.bf16.mxu0 %v915
    %1128 = vmatpush1.bf16.msra.mxu0 %v914
    %1129 = vmatprep.subr.bf16.mxu0 %v911
    %1130 = vmatpush1.bf16.msra.mxu0 %v910
    %1131 = vmatprep.subr.bf16.mxu0 %v907
    %1132 = vmatpush1.bf16.msra.mxu0 %v906
    %1133 = vmatprep.subr.bf16.mxu0 %v903
    %1134 = vmatpush1.bf16.msra.mxu0 %v902
    %1135 = vmatprep.subr.bf16.mxu0 %v899
    %1136 = vmatpush1.bf16.msra.mxu0 %v898
    %1137 = vmatprep.subr.bf16.mxu0 %v895
    %1138 = vmatpush1.bf16.msra.mxu0 %v894
    %1139 = vmatprep.subr.bf16.mxu0 %v891
    %1140 = vmatpush1.bf16.msra.mxu0 %v890
    %1141 = vmatprep.subr.bf16.mxu0 %v951
    %1142 = vmatpush2.bf16.msra.mxu0 %v950
    %1143 = vmatprep.subr.bf16.mxu0 %v947
    %1144 = vmatpush2.bf16.msra.mxu0 %v946
    %1145 = vmatprep.subr.bf16.mxu0 %v943
    %1146 = vmatpush2.bf16.msra.mxu0 %v942
    %1147 = vmatprep.subr.bf16.mxu0 %v939
    %1148 = vmatpush2.bf16.msra.mxu0 %v938
    %1149 = vmatprep.subr.bf16.mxu0 %v935
    %1150 = vmatpush2.bf16.msra.mxu0 %v934
    %1151 = vmatprep.subr.bf16.mxu0 %v931
    %1152 = vmatpush2.bf16.msra.mxu0 %v930
    %1153 = vmatprep.subr.bf16.mxu0 %v927
    %1154 = vmatpush2.bf16.msra.mxu0 %v926
    %1155 = vmatprep.subr.bf16.mxu0 %v923
    %1156 = vmatpush2.bf16.msra.mxu0 %v922
    %1157 = vmatprep.mubr.bf16.mxu0 %v291
    %1158 = vmatmul.mubr.bf16.gmra.mxu0 %v290
    %v1159 = vpop.f32.mrf.mxu0
    %v1160 = vadd.f32 %v1117, %v1159
    %v1161 = vpop.f32.mrf.mxu0
    %v1162 = vadd.f32 %v1119, %v1161
    %v1163 = vpop.f32.mrf.mxu0
    %v1164 = vadd.f32 %v1121, %v1163
    %v1165 = vpop.f32.mrf.mxu0
    %v1166 = vadd.f32 %v1123, %v1165
    %1167 = vdwg.mxu0
    %1168 = vmatprep.subr.bf16.mxu0 %v857
    %1169 = vmatpush1.bf16.msra.mxu0 %v856
    %1170 = vmatprep.subr.bf16.mxu0 %v853
    %1171 = vmatpush1.bf16.msra.mxu0 %v852
    %1172 = vmatprep.subr.bf16.mxu0 %v849
    %1173 = vmatpush1.bf16.msra.mxu0 %v848
    %1174 = vmatprep.subr.bf16.mxu0 %v845
    %1175 = vmatpush1.bf16.msra.mxu0 %v844
    %1176 = vmatprep.subr.bf16.mxu0 %v841
    %1177 = vmatpush1.bf16.msra.mxu0 %v840
    %1178 = vmatprep.subr.bf16.mxu0 %v837
    %1179 = vmatpush1.bf16.msra.mxu0 %v836
    %1180 = vmatprep.subr.bf16.mxu0 %v833
    %1181 = vmatpush1.bf16.msra.mxu0 %v832
    %1182 = vmatprep.subr.bf16.mxu0 %v829
    %1183 = vmatpush1.bf16.msra.mxu0 %v828
    %1184 = vmatprep.subr.bf16.mxu0 %v889
    %1185 = vmatpush2.bf16.msra.mxu0 %v888
    %1186 = vmatprep.subr.bf16.mxu0 %v885
    %1187 = vmatpush2.bf16.msra.mxu0 %v884
    %1188 = vmatprep.subr.bf16.mxu0 %v881
    %1189 = vmatpush2.bf16.msra.mxu0 %v880
    %1190 = vmatprep.subr.bf16.mxu0 %v877
    %1191 = vmatpush2.bf16.msra.mxu0 %v876
    %1192 = vmatprep.subr.bf16.mxu0 %v873
    %1193 = vmatpush2.bf16.msra.mxu0 %v872
    %1194 = vmatprep.subr.bf16.mxu0 %v869
    %1195 = vmatpush2.bf16.msra.mxu0 %v868
    %1196 = vmatprep.subr.bf16.mxu0 %v865
    %1197 = vmatpush2.bf16.msra.mxu0 %v864
    %1198 = vmatprep.subr.bf16.mxu0 %v861
    %1199 = vmatpush2.bf16.msra.mxu0 %v860
    %1200 = vmatprep.mubr.bf16.mxu0 %v289
    %1201 = vmatmul.mubr.bf16.gmra.mxu0 %v288
    %v1202 = vpop.f32.mrf.mxu0
    %v1203 = vadd.f32 %v433, %v1202
    %v1204 = vpop.f32.mrf.mxu0
    %v1205 = vadd.f32 %v437, %v1204
    %v1206 = vpop.f32.mrf.mxu0
    %v1207 = vadd.f32 %v433, %v1206
    %v1208 = vpop.f32.mrf.mxu0
    %v1209 = vadd.f32 %v437, %v1208
    %1210 = vdwg.mxu0
    %1211 = vmatprep.subr.bf16.mxu0 %v921
    %1212 = vmatpush1.bf16.msra.mxu0 %v920
    %1213 = vmatprep.subr.bf16.mxu0 %v917
    %1214 = vmatpush1.bf16.msra.mxu0 %v916
    %1215 = vmatprep.subr.bf16.mxu0 %v913
    %1216 = vmatpush1.bf16.msra.mxu0 %v912
    %1217 = vmatprep.subr.bf16.mxu0 %v909
    %1218 = vmatpush1.bf16.msra.mxu0 %v908
    %1219 = vmatprep.subr.bf16.mxu0 %v905
    %1220 = vmatpush1.bf16.msra.mxu0 %v904
    %1221 = vmatprep.subr.bf16.mxu0 %v901
    %1222 = vmatpush1.bf16.msra.mxu0 %v900
    %1223 = vmatprep.subr.bf16.mxu0 %v897
    %1224 = vmatpush1.bf16.msra.mxu0 %v896
    %1225 = vmatprep.subr.bf16.mxu0 %v893
    %1226 = vmatpush1.bf16.msra.mxu0 %v892
    %1227 = vmatprep.subr.bf16.mxu0 %v953
    %1228 = vmatpush2.bf16.msra.mxu0 %v952
    %1229 = vmatprep.subr.bf16.mxu0 %v949
    %1230 = vmatpush2.bf16.msra.mxu0 %v948
    %1231 = vmatprep.subr.bf16.mxu0 %v945
    %1232 = vmatpush2.bf16.msra.mxu0 %v944
    %1233 = vmatprep.subr.bf16.mxu0 %v941
    %1234 = vmatpush2.bf16.msra.mxu0 %v940
    %1235 = vmatprep.subr.bf16.mxu0 %v937
    %1236 = vmatpush2.bf16.msra.mxu0 %v936
    %1237 = vmatprep.subr.bf16.mxu0 %v933
    %1238 = vmatpush2.bf16.msra.mxu0 %v932
    %1239 = vmatprep.subr.bf16.mxu0 %v929
    %1240 = vmatpush2.bf16.msra.mxu0 %v928
    %1241 = vmatprep.subr.bf16.mxu0 %v925
    %1242 = vmatpush2.bf16.msra.mxu0 %v924
    %1243 = vmatprep.mubr.bf16.mxu0 %v291
    %1244 = vmatmul.mubr.bf16.gmra.mxu0 %v290
    %v1245 = vpop.f32.mrf.mxu0
    %v1246 = vadd.f32 %v1203, %v1245
    %v1247 = vpop.f32.mrf.mxu0
    %v1248 = vadd.f32 %v1205, %v1247
    %v1249 = vpop.f32.mrf.mxu0
    %v1250 = vadd.f32 %v1207, %v1249
    %v1251 = vpop.f32.mrf.mxu0
    %v1252 = vadd.f32 %v1209, %v1251
    %1253 = vdwg.mxu0
    %v1254 = vmax.f32 %v1160, 0.0
    %v1255 = vmax.f32 %v1162, 0.0
    %v1256 = vmax.f32 %v1246, 0.0
    %v1257 = vmax.f32 %v1248, 0.0
    %v1258 = vmax.f32 %v1164, 0.0
    %v1259 = vmax.f32 %v1166, 0.0
    %v1260 = vmax.f32 %v1250, 0.0
    %v1261 = vmax.f32 %v1252, 0.0
    %v1262 = vadd.f32 %v1254, %v1255
    %v1263 = vadd.f32 %v1262, %v1256
    %v1264 = vadd.f32 %v1263, %v1257
    %1265 = vadd.xlane.f32.xlu0 %v1264
    %v1266 = vpop.xlane.xlu0 %1265
    %v1267 = vadd.f32 %v1258, %v1259
    %v1268 = vadd.f32 %v1267, %v1260
    %v1269 = vadd.f32 %v1268, %v1261
    %1270 = vadd.xlane.f32.xlu0 %v1269
    %v1271 = vpop.xlane.xlu0 %1270
    %v1272 = vmul.f32 %v1254, %v1254
    %v1273 = vmul.f32 %v1255, %v1255
    %v1274 = vmul.f32 %v1256, %v1256
    %v1275 = vmul.f32 %v1257, %v1257
    %v1276 = vmul.f32 %v1258, %v1258
    %v1277 = vmul.f32 %v1259, %v1259
    %v1278 = vmul.f32 %v1260, %v1260
    %v1279 = vmul.f32 %v1261, %v1261
    %v1280 = vadd.f32 %v1272, %v1273
    %v1281 = vadd.f32 %v1280, %v1274
    %v1282 = vadd.f32 %v1281, %v1275
    %1283 = vadd.xlane.f32.xlu0 %v1282
    %v1284 = vpop.xlane.xlu0 %1283
    %v1285 = vadd.f32 %v1276, %v1277
    %v1286 = vadd.f32 %v1285, %v1278
    %v1287 = vadd.f32 %v1286, %v1279
    %1288 = vadd.xlane.f32.xlu0 %v1287
    %v1289 = vpop.xlane.xlu0 %1288
    %v1290 = vmul.f32 %v1266, 0.001953125
    %v1291 = vmul.f32 %v1271, 0.001953125
    %v1292 = vmul.f32 %v1284, 0.001953125
    %v1293 = vmul.f32 %v1289, 0.001953125
    %v1294 = vmul.f32 %v1290, %v1290
    %v1295 = vmul.f32 %v1291, %v1291
    %v1296 = vsub.f32 %v1292, %v1294
    %v1297 = vsub.f32 %v1293, %v1295
    %v1298 = vmax.f32 %v1296, 0.0
    %v1299 = vmax.f32 %v1297, 0.0
    %v1300 = vsub.f32 %v1254, %v1290
    %v1301 = vsub.f32 %v1255, %v1290
    %v1302 = vsub.f32 %v1256, %v1290
    %v1303 = vsub.f32 %v1257, %v1290
    %v1304 = vsub.f32 %v1258, %v1291
    %v1305 = vsub.f32 %v1259, %v1291
    %v1306 = vsub.f32 %v1260, %v1291
    %v1307 = vsub.f32 %v1261, %v1291
    %v1308 = vadd.f32 %v1298, 1e-05
    %v1309 = vadd.f32 %v1299, 1e-05
    %v1310 = vrsqrt.pop %v1308
    %v1311 = vrsqrt.pop %v1309
    %v1312 = vmul.f32 %v1300, %v1310
    %v1313 = vmul.f32 %v1301, %v1310
    %v1314 = vmul.f32 %v1302, %v1310
    %v1315 = vmul.f32 %v1303, %v1310
    %v1316 = vmul.f32 %v1304, %v1311
    %v1317 = vmul.f32 %v1305, %v1311
    %v1318 = vmul.f32 %v1306, %v1311
    %v1319 = vmul.f32 %v1307, %v1311
    %v1320 = vpack.c.bf16 %v1316, %v1312
    %v1321 = vpack.c.bf16 %v1317, %v1313
    %v1322 = vpack.c.bf16 %v1318, %v1314
    %v1323 = vpack.c.bf16 %v1319, %v1315
    %v1324 = vld [vmem:[#allocation5] sm:$0xff]
    %v1325 = vld [vmem:[#allocation5 + $0x8] sm:$0xff]
    %v1326 = vld [vmem:[#allocation5 + $0x10] sm:$0xff]
    %v1327 = vld [vmem:[#allocation5 + $0x18] sm:$0xff]
    %v1328 = vld [vmem:[#allocation5 + $0x20] sm:$0xff]
    %v1329 = vld [vmem:[#allocation5 + $0x28] sm:$0xff]
    %v1330 = vld [vmem:[#allocation5 + $0x30] sm:$0xff]
    %v1331 = vld [vmem:[#allocation5 + $0x38] sm:$0xff]
    %v1332 = vld [vmem:[#allocation5 + $0x40] sm:$0xff]
    %v1333 = vld [vmem:[#allocation5 + $0x48] sm:$0xff]
    %v1334 = vld [vmem:[#allocation5 + $0x50] sm:$0xff]
    %v1335 = vld [vmem:[#allocation5 + $0x58] sm:$0xff]
    %v1336 = vld [vmem:[#allocation5 + $0x60] sm:$0xff]
    %v1337 = vld [vmem:[#allocation5 + $0x68] sm:$0xff]
    %v1338 = vld [vmem:[#allocation5 + $0x70] sm:$0xff]
    %v1339 = vld [vmem:[#allocation5 + $0x78] sm:$0xff]
    %v1340 = vld [vmem:[#allocation5 + $0x80] sm:$0xff]
    %v1341 = vld [vmem:[#allocation5 + $0x88] sm:$0xff]
    %v1342 = vld [vmem:[#allocation5 + $0x90] sm:$0xff]
    %v1343 = vld [vmem:[#allocation5 + $0x98] sm:$0xff]
    %v1344 = vld [vmem:[#allocation5 + $0xa0] sm:$0xff]
    %v1345 = vld [vmem:[#allocation5 + $0xa8] sm:$0xff]
    %v1346 = vld [vmem:[#allocation5 + $0xb0] sm:$0xff]
    %v1347 = vld [vmem:[#allocation5 + $0xb8] sm:$0xff]
    %v1348 = vld [vmem:[#allocation5 + $0xc0] sm:$0xff]
    %v1349 = vld [vmem:[#allocation5 + $0xc8] sm:$0xff]
    %v1350 = vld [vmem:[#allocation5 + $0xd0] sm:$0xff]
    %v1351 = vld [vmem:[#allocation5 + $0xd8] sm:$0xff]
    %v1352 = vld [vmem:[#allocation5 + $0xe0] sm:$0xff]
    %v1353 = vld [vmem:[#allocation5 + $0xe8] sm:$0xff]
    %v1354 = vld [vmem:[#allocation5 + $0xf0] sm:$0xff]
    %v1355 = vld [vmem:[#allocation5 + $0xf8] sm:$0xff]
    %v1356 = vld [vmem:[#allocation5 + $0x100] sm:$0xff]
    %v1357 = vld [vmem:[#allocation5 + $0x108] sm:$0xff]
    %v1358 = vld [vmem:[#allocation5 + $0x110] sm:$0xff]
    %v1359 = vld [vmem:[#allocation5 + $0x118] sm:$0xff]
    %v1360 = vld [vmem:[#allocation5 + $0x120] sm:$0xff]
    %v1361 = vld [vmem:[#allocation5 + $0x128] sm:$0xff]
    %v1362 = vld [vmem:[#allocation5 + $0x130] sm:$0xff]
    %v1363 = vld [vmem:[#allocation5 + $0x138] sm:$0xff]
    %v1364 = vld [vmem:[#allocation5 + $0x140] sm:$0xff]
    %v1365 = vld [vmem:[#allocation5 + $0x148] sm:$0xff]
    %v1366 = vld [vmem:[#allocation5 + $0x150] sm:$0xff]
    %v1367 = vld [vmem:[#allocation5 + $0x158] sm:$0xff]
    %v1368 = vld [vmem:[#allocation5 + $0x160] sm:$0xff]
    %v1369 = vld [vmem:[#allocation5 + $0x168] sm:$0xff]
    %v1370 = vld [vmem:[#allocation5 + $0x170] sm:$0xff]
    %v1371 = vld [vmem:[#allocation5 + $0x178] sm:$0xff]
    %v1372 = vld [vmem:[#allocation5 + $0x180] sm:$0xff]
    %v1373 = vld [vmem:[#allocation5 + $0x188] sm:$0xff]
    %v1374 = vld [vmem:[#allocation5 + $0x190] sm:$0xff]
    %v1375 = vld [vmem:[#allocation5 + $0x198] sm:$0xff]
    %v1376 = vld [vmem:[#allocation5 + $0x1a0] sm:$0xff]
    %v1377 = vld [vmem:[#allocation5 + $0x1a8] sm:$0xff]
    %v1378 = vld [vmem:[#allocation5 + $0x1b0] sm:$0xff]
    %v1379 = vld [vmem:[#allocation5 + $0x1b8] sm:$0xff]
    %v1380 = vld [vmem:[#allocation5 + $0x1c0] sm:$0xff]
    %v1381 = vld [vmem:[#allocation5 + $0x1c8] sm:$0xff]
    %v1382 = vld [vmem:[#allocation5 + $0x1d0] sm:$0xff]
    %v1383 = vld [vmem:[#allocation5 + $0x1d8] sm:$0xff]
    %v1384 = vld [vmem:[#allocation5 + $0x1e0] sm:$0xff]
    %v1385 = vld [vmem:[#allocation5 + $0x1e8] sm:$0xff]
    %v1386 = vld [vmem:[#allocation5 + $0x1f0] sm:$0xff]
    %v1387 = vld [vmem:[#allocation5 + $0x1f8] sm:$0xff]
    %v1388 = vld [vmem:[%s6] sm:$0x3]
    %v1390 = vlaneseq
    %v1391 = vshrl.u32 %v1390, 7
    %v1392 = vsub.s32 0, %v1391
    %v1393 = vrot.slane %v1388, %v1392
    %v1394 = vlaneseq
    %v1395 = vshrl.u32 %v1394, 7
    %v1396 = vsub.s32 1, %v1395
    %v1397 = vrot.slane %v1388, %v1396
    %v1464 = vunpack.c.l.b16 %v1324
    %v1465 = vunpack.c.h.b16 %v1324
    %v1466 = vunpack.c.l.b16 %v1325
    %v1467 = vunpack.c.h.b16 %v1325
    %v1468 = vunpack.c.l.b16 %v1326
    %v1469 = vunpack.c.h.b16 %v1326
    %v1470 = vunpack.c.l.b16 %v1327
    %v1471 = vunpack.c.h.b16 %v1327
    %v1472 = vunpack.c.l.b16 %v1328
    %v1473 = vunpack.c.h.b16 %v1328
    %v1474 = vunpack.c.l.b16 %v1329
    %v1475 = vunpack.c.h.b16 %v1329
    %v1476 = vunpack.c.l.b16 %v1330
    %v1477 = vunpack.c.h.b16 %v1330
    %v1478 = vunpack.c.l.b16 %v1331
    %v1479 = vunpack.c.h.b16 %v1331
    %v1480 = vunpack.c.l.b16 %v1332
    %v1481 = vunpack.c.h.b16 %v1332
    %v1482 = vunpack.c.l.b16 %v1333
    %v1483 = vunpack.c.h.b16 %v1333
    %v1484 = vunpack.c.l.b16 %v1334
    %v1485 = vunpack.c.h.b16 %v1334
    %v1486 = vunpack.c.l.b16 %v1335
    %v1487 = vunpack.c.h.b16 %v1335
    %v1488 = vunpack.c.l.b16 %v1336
    %v1489 = vunpack.c.h.b16 %v1336
    %v1490 = vunpack.c.l.b16 %v1337
    %v1491 = vunpack.c.h.b16 %v1337
    %v1492 = vunpack.c.l.b16 %v1338
    %v1493 = vunpack.c.h.b16 %v1338
    %v1494 = vunpack.c.l.b16 %v1339
    %v1495 = vunpack.c.h.b16 %v1339
    %v1496 = vunpack.c.l.b16 %v1340
    %v1497 = vunpack.c.h.b16 %v1340
    %v1498 = vunpack.c.l.b16 %v1341
    %v1499 = vunpack.c.h.b16 %v1341
    %v1500 = vunpack.c.l.b16 %v1342
    %v1501 = vunpack.c.h.b16 %v1342
    %v1502 = vunpack.c.l.b16 %v1343
    %v1503 = vunpack.c.h.b16 %v1343
    %v1504 = vunpack.c.l.b16 %v1344
    %v1505 = vunpack.c.h.b16 %v1344
    %v1506 = vunpack.c.l.b16 %v1345
    %v1507 = vunpack.c.h.b16 %v1345
    %v1508 = vunpack.c.l.b16 %v1346
    %v1509 = vunpack.c.h.b16 %v1346
    %v1510 = vunpack.c.l.b16 %v1347
    %v1511 = vunpack.c.h.b16 %v1347
    %v1512 = vunpack.c.l.b16 %v1348
    %v1513 = vunpack.c.h.b16 %v1348
    %v1514 = vunpack.c.l.b16 %v1349
    %v1515 = vunpack.c.h.b16 %v1349
    %v1516 = vunpack.c.l.b16 %v1350
    %v1517 = vunpack.c.h.b16 %v1350
    %v1518 = vunpack.c.l.b16 %v1351
    %v1519 = vunpack.c.h.b16 %v1351
    %v1520 = vunpack.c.l.b16 %v1352
    %v1521 = vunpack.c.h.b16 %v1352
    %v1522 = vunpack.c.l.b16 %v1353
    %v1523 = vunpack.c.h.b16 %v1353
    %v1524 = vunpack.c.l.b16 %v1354
    %v1525 = vunpack.c.h.b16 %v1354
    %v1526 = vunpack.c.l.b16 %v1355
    %v1527 = vunpack.c.h.b16 %v1355
    %v1528 = vunpack.c.l.b16 %v1356
    %v1529 = vunpack.c.h.b16 %v1356
    %v1530 = vunpack.c.l.b16 %v1357
    %v1531 = vunpack.c.h.b16 %v1357
    %v1532 = vunpack.c.l.b16 %v1358
    %v1533 = vunpack.c.h.b16 %v1358
    %v1534 = vunpack.c.l.b16 %v1359
    %v1535 = vunpack.c.h.b16 %v1359
    %v1536 = vunpack.c.l.b16 %v1360
    %v1537 = vunpack.c.h.b16 %v1360
    %v1538 = vunpack.c.l.b16 %v1361
    %v1539 = vunpack.c.h.b16 %v1361
    %v1540 = vunpack.c.l.b16 %v1362
    %v1541 = vunpack.c.h.b16 %v1362
    %v1542 = vunpack.c.l.b16 %v1363
    %v1543 = vunpack.c.h.b16 %v1363
    %v1544 = vunpack.c.l.b16 %v1364
    %v1545 = vunpack.c.h.b16 %v1364
    %v1546 = vunpack.c.l.b16 %v1365
    %v1547 = vunpack.c.h.b16 %v1365
    %v1548 = vunpack.c.l.b16 %v1366
    %v1549 = vunpack.c.h.b16 %v1366
    %v1550 = vunpack.c.l.b16 %v1367
    %v1551 = vunpack.c.h.b16 %v1367
    %v1552 = vunpack.c.l.b16 %v1368
    %v1553 = vunpack.c.h.b16 %v1368
    %v1554 = vunpack.c.l.b16 %v1369
    %v1555 = vunpack.c.h.b16 %v1369
    %v1556 = vunpack.c.l.b16 %v1370
    %v1557 = vunpack.c.h.b16 %v1370
    %v1558 = vunpack.c.l.b16 %v1371
    %v1559 = vunpack.c.h.b16 %v1371
    %v1560 = vunpack.c.l.b16 %v1372
    %v1561 = vunpack.c.h.b16 %v1372
    %v1562 = vunpack.c.l.b16 %v1373
    %v1563 = vunpack.c.h.b16 %v1373
    %v1564 = vunpack.c.l.b16 %v1374
    %v1565 = vunpack.c.h.b16 %v1374
    %v1566 = vunpack.c.l.b16 %v1375
    %v1567 = vunpack.c.h.b16 %v1375
    %v1568 = vunpack.c.l.b16 %v1376
    %v1569 = vunpack.c.h.b16 %v1376
    %v1570 = vunpack.c.l.b16 %v1377
    %v1571 = vunpack.c.h.b16 %v1377
    %v1572 = vunpack.c.l.b16 %v1378
    %v1573 = vunpack.c.h.b16 %v1378
    %v1574 = vunpack.c.l.b16 %v1379
    %v1575 = vunpack.c.h.b16 %v1379
    %v1576 = vunpack.c.l.b16 %v1380
    %v1577 = vunpack.c.h.b16 %v1380
    %v1578 = vunpack.c.l.b16 %v1381
    %v1579 = vunpack.c.h.b16 %v1381
    %v1580 = vunpack.c.l.b16 %v1382
    %v1581 = vunpack.c.h.b16 %v1382
    %v1582 = vunpack.c.l.b16 %v1383
    %v1583 = vunpack.c.h.b16 %v1383
    %v1584 = vunpack.c.l.b16 %v1384
    %v1585 = vunpack.c.h.b16 %v1384
    %v1586 = vunpack.c.l.b16 %v1385
    %v1587 = vunpack.c.h.b16 %v1385
    %v1588 = vunpack.c.l.b16 %v1386
    %v1589 = vunpack.c.h.b16 %v1386
    %v1590 = vunpack.c.l.b16 %v1387
    %v1591 = vunpack.c.h.b16 %v1387
    %v1592 = vpack.c.b16 %v1466, %v1464
    %v1593 = vpack.c.b16 %v1467, %v1465
    %v1594 = vpack.c.b16 %v1470, %v1468
    %v1595 = vpack.c.b16 %v1471, %v1469
    %v1596 = vpack.c.b16 %v1474, %v1472
    %v1597 = vpack.c.b16 %v1475, %v1473
    %v1598 = vpack.c.b16 %v1478, %v1476
    %v1599 = vpack.c.b16 %v1479, %v1477
    %v1600 = vpack.c.b16 %v1482, %v1480
    %v1601 = vpack.c.b16 %v1483, %v1481
    %v1602 = vpack.c.b16 %v1486, %v1484
    %v1603 = vpack.c.b16 %v1487, %v1485
    %v1604 = vpack.c.b16 %v1490, %v1488
    %v1605 = vpack.c.b16 %v1491, %v1489
    %v1606 = vpack.c.b16 %v1494, %v1492
    %v1607 = vpack.c.b16 %v1495, %v1493
    %v1608 = vpack.c.b16 %v1498, %v1496
    %v1609 = vpack.c.b16 %v1499, %v1497
    %v1610 = vpack.c.b16 %v1502, %v1500
    %v1611 = vpack.c.b16 %v1503, %v1501
    %v1612 = vpack.c.b16 %v1506, %v1504
    %v1613 = vpack.c.b16 %v1507, %v1505
    %v1614 = vpack.c.b16 %v1510, %v1508
    %v1615 = vpack.c.b16 %v1511, %v1509
    %v1616 = vpack.c.b16 %v1514, %v1512
    %v1617 = vpack.c.b16 %v1515, %v1513
    %v1618 = vpack.c.b16 %v1518, %v1516
    %v1619 = vpack.c.b16 %v1519, %v1517
    %v1620 = vpack.c.b16 %v1522, %v1520
    %v1621 = vpack.c.b16 %v1523, %v1521
    %v1622 = vpack.c.b16 %v1526, %v1524
    %v1623 = vpack.c.b16 %v1527, %v1525
    %v1624 = vpack.c.b16 %v1530, %v1528
    %v1625 = vpack.c.b16 %v1531, %v1529
    %v1626 = vpack.c.b16 %v1534, %v1532
    %v1627 = vpack.c.b16 %v1535, %v1533
    %v1628 = vpack.c.b16 %v1538, %v1536
    %v1629 = vpack.c.b16 %v1539, %v1537
    %v1630 = vpack.c.b16 %v1542, %v1540
    %v1631 = vpack.c.b16 %v1543, %v1541
    %v1632 = vpack.c.b16 %v1546, %v1544
    %v1633 = vpack.c.b16 %v1547, %v1545
    %v1634 = vpack.c.b16 %v1550, %v1548
    %v1635 = vpack.c.b16 %v1551, %v1549
    %v1636 = vpack.c.b16 %v1554, %v1552
    %v1637 = vpack.c.b16 %v1555, %v1553
    %v1638 = vpack.c.b16 %v1558, %v1556
    %v1639 = vpack.c.b16 %v1559, %v1557
    %v1640 = vpack.c.b16 %v1562, %v1560
    %v1641 = vpack.c.b16 %v1563, %v1561
    %v1642 = vpack.c.b16 %v1566, %v1564
    %v1643 = vpack.c.b16 %v1567, %v1565
    %v1644 = vpack.c.b16 %v1570, %v1568
    %v1645 = vpack.c.b16 %v1571, %v1569
    %v1646 = vpack.c.b16 %v1574, %v1572
    %v1647 = vpack.c.b16 %v1575, %v1573
    %v1648 = vpack.c.b16 %v1578, %v1576
    %v1649 = vpack.c.b16 %v1579, %v1577
    %v1650 = vpack.c.b16 %v1582, %v1580
    %v1651 = vpack.c.b16 %v1583, %v1581
    %v1652 = vpack.c.b16 %v1586, %v1584
    %v1653 = vpack.c.b16 %v1587, %v1585
    %v1654 = vpack.c.b16 %v1590, %v1588
    %v1655 = vpack.c.b16 %v1591, %v1589
    %1720 = vmatprep.subr.bf16.mxu0 %v1607
    %1721 = vmatpush1.bf16.msra.mxu0 %v1606
    %1722 = vmatprep.subr.bf16.mxu0 %v1605
    %1723 = vmatpush1.bf16.msra.mxu0 %v1604
    %1724 = vmatprep.subr.bf16.mxu0 %v1603
    %1725 = vmatpush1.bf16.msra.mxu0 %v1602
    %1726 = vmatprep.subr.bf16.mxu0 %v1601
    %1727 = vmatpush1.bf16.msra.mxu0 %v1600
    %1728 = vmatprep.subr.bf16.mxu0 %v1599
    %1729 = vmatpush1.bf16.msra.mxu0 %v1598
    %1730 = vmatprep.subr.bf16.mxu0 %v1597
    %1731 = vmatpush1.bf16.msra.mxu0 %v1596
    %1732 = vmatprep.subr.bf16.mxu0 %v1595
    %1733 = vmatpush1.bf16.msra.mxu0 %v1594
    %1734 = vmatprep.subr.bf16.mxu0 %v1593
    %1735 = vmatpush1.bf16.msra.mxu0 %v1592
    %1736 = vmatprep.subr.bf16.mxu0 %v1623
    %1737 = vmatpush2.bf16.msra.mxu0 %v1622
    %1738 = vmatprep.subr.bf16.mxu0 %v1621
    %1739 = vmatpush2.bf16.msra.mxu0 %v1620
    %1740 = vmatprep.subr.bf16.mxu0 %v1619
    %1741 = vmatpush2.bf16.msra.mxu0 %v1618
    %1742 = vmatprep.subr.bf16.mxu0 %v1617
    %1743 = vmatpush2.bf16.msra.mxu0 %v1616
    %1744 = vmatprep.subr.bf16.mxu0 %v1615
    %1745 = vmatpush2.bf16.msra.mxu0 %v1614
    %1746 = vmatprep.subr.bf16.mxu0 %v1613
    %1747 = vmatpush2.bf16.msra.mxu0 %v1612
    %1748 = vmatprep.subr.bf16.mxu0 %v1611
    %1749 = vmatpush2.bf16.msra.mxu0 %v1610
    %1750 = vmatprep.subr.bf16.mxu0 %v1609
    %1751 = vmatpush2.bf16.msra.mxu0 %v1608
    %1752 = vmatprep.mubr.bf16.mxu0 %v1321
    %1753 = vmatmul.mubr.bf16.gmra.mxu0 %v1320
    %v1754 = vpop.f32.mrf.mxu0
    %v1755 = vadd.f32 %v1393, %v1754
    %v1756 = vpop.f32.mrf.mxu0
    %v1757 = vadd.f32 %v1397, %v1756
    %v1758 = vpop.f32.mrf.mxu0
    %v1759 = vadd.f32 %v1393, %v1758
    %v1760 = vpop.f32.mrf.mxu0
    %v1761 = vadd.f32 %v1397, %v1760
    %1762 = vdwg.mxu0
    %1763 = vmatprep.subr.bf16.mxu0 %v1639
    %1764 = vmatpush1.bf16.msra.mxu0 %v1638
    %1765 = vmatprep.subr.bf16.mxu0 %v1637
    %1766 = vmatpush1.bf16.msra.mxu0 %v1636
    %1767 = vmatprep.subr.bf16.mxu0 %v1635
    %1768 = vmatpush1.bf16.msra.mxu0 %v1634
    %1769 = vmatprep.subr.bf16.mxu0 %v1633
    %1770 = vmatpush1.bf16.msra.mxu0 %v1632
    %1771 = vmatprep.subr.bf16.mxu0 %v1631
    %1772 = vmatpush1.bf16.msra.mxu0 %v1630
    %1773 = vmatprep.subr.bf16.mxu0 %v1629
    %1774 = vmatpush1.bf16.msra.mxu0 %v1628
    %1775 = vmatprep.subr.bf16.mxu0 %v1627
    %1776 = vmatpush1.bf16.msra.mxu0 %v1626
    %1777 = vmatprep.subr.bf16.mxu0 %v1625
    %1778 = vmatpush1.bf16.msra.mxu0 %v1624
    %1779 = vmatprep.subr.bf16.mxu0 %v1655
    %1780 = vmatpush2.bf16.msra.mxu0 %v1654
    %1781 = vmatprep.subr.bf16.mxu0 %v1653
    %1782 = vmatpush2.bf16.msra.mxu0 %v1652
    %1783 = vmatprep.subr.bf16.mxu0 %v1651
    %1784 = vmatpush2.bf16.msra.mxu0 %v1650
    %1785 = vmatprep.subr.bf16.mxu0 %v1649
    %1786 = vmatpush2.bf16.msra.mxu0 %v1648
    %1787 = vmatprep.subr.bf16.mxu0 %v1647
    %1788 = vmatpush2.bf16.msra.mxu0 %v1646
    %1789 = vmatprep.subr.bf16.mxu0 %v1645
    %1790 = vmatpush2.bf16.msra.mxu0 %v1644
    %1791 = vmatprep.subr.bf16.mxu0 %v1643
    %1792 = vmatpush2.bf16.msra.mxu0 %v1642
    %1793 = vmatprep.subr.bf16.mxu0 %v1641
    %1794 = vmatpush2.bf16.msra.mxu0 %v1640
    %1795 = vmatprep.mubr.bf16.mxu0 %v1323
    %1796 = vmatmul.mubr.bf16.gmra.mxu0 %v1322
    %v1797 = vpop.f32.mrf.mxu0
    %v1798 = vadd.f32 %v1755, %v1797
    %v1799 = vpop.f32.mrf.mxu0
    %v1800 = vadd.f32 %v1757, %v1799
    %v1801 = vpop.f32.mrf.mxu0
    %v1802 = vadd.f32 %v1759, %v1801
    %v1803 = vpop.f32.mrf.mxu0
    %v1804 = vadd.f32 %v1761, %v1803
    %1805 = vdwg.mxu0
    %v1806 = vmax.f32 %v1798, 0.0
    %v1807 = vmax.f32 %v1800, 0.0
    %v1808 = vmax.f32 %v1802, 0.0
    %v1809 = vmax.f32 %v1804, 0.0
    %v1810 = vadd.f32 %v1806, %v1807
    %1811 = vadd.xlane.f32.xlu0 %v1810
    %v1812 = vpop.xlane.xlu0 %1811
    %v1813 = vadd.f32 %v1808, %v1809
    %1814 = vadd.xlane.f32.xlu0 %v1813
    %v1815 = vpop.xlane.xlu0 %1814
    %v1816 = vmul.f32 %v1806, %v1806
    %v1817 = vmul.f32 %v1807, %v1807
    %v1818 = vmul.f32 %v1808, %v1808
    %v1819 = vmul.f32 %v1809, %v1809
    %v1820 = vadd.f32 %v1816, %v1817
    %1821 = vadd.xlane.f32.xlu0 %v1820
    %v1822 = vpop.xlane.xlu0 %1821
    %v1823 = vadd.f32 %v1818, %v1819
    %1824 = vadd.xlane.f32.xlu0 %v1823
    %v1825 = vpop.xlane.xlu0 %1824
    %v1826 = vmul.f32 %v1812, 0.00390625
    %v1827 = vmul.f32 %v1815, 0.00390625
    %v1828 = vmul.f32 %v1822, 0.00390625
    %v1829 = vmul.f32 %v1825, 0.00390625
    %v1830 = vmul.f32 %v1826, %v1826
    %v1831 = vmul.f32 %v1827, %v1827
    %v1832 = vsub.f32 %v1828, %v1830
    %v1833 = vsub.f32 %v1829, %v1831
    %v1834 = vmax.f32 %v1832, 0.0
    %v1835 = vmax.f32 %v1833, 0.0
    %v1836 = vsub.f32 %v1806, %v1826
    %v1837 = vsub.f32 %v1807, %v1826
    %v1838 = vsub.f32 %v1808, %v1827
    %v1839 = vsub.f32 %v1809, %v1827
    %v1840 = vadd.f32 %v1834, 1e-05
    %v1841 = vadd.f32 %v1835, 1e-05
    %v1842 = vrsqrt.pop %v1840
    %v1843 = vrsqrt.pop %v1841
    %v1844 = vmul.f32 %v1836, %v1842
    %v1845 = vmul.f32 %v1837, %v1842
    %v1846 = vmul.f32 %v1838, %v1843
    %v1847 = vmul.f32 %v1839, %v1843
    %v1848 = vpack.c.bf16 %v1846, %v1844
    %v1849 = vpack.c.bf16 %v1847, %v1845
    %v1850 = vld [vmem:[#allocation7] sm:$0xff]
    %v1851 = vld [vmem:[#allocation7 + $0x8] sm:$0xff]
    %v1852 = vld [vmem:[#allocation7 + $0x10] sm:$0xff]
    %v1853 = vld [vmem:[#allocation7 + $0x18] sm:$0xff]
    %v1854 = vld [vmem:[#allocation7 + $0x20] sm:$0xff]
    %v1855 = vld [vmem:[#allocation7 + $0x28] sm:$0xff]
    %v1856 = vld [vmem:[#allocation7 + $0x30] sm:$0xff]
    %v1857 = vld [vmem:[#allocation7 + $0x38] sm:$0xff]
    %v1858 = vld [vmem:[#allocation7 + $0x40] sm:$0xff]
    %v1859 = vld [vmem:[#allocation7 + $0x48] sm:$0xff]
    %v1860 = vld [vmem:[#allocation7 + $0x50] sm:$0xff]
    %v1861 = vld [vmem:[#allocation7 + $0x58] sm:$0xff]
    %v1862 = vld [vmem:[#allocation7 + $0x60] sm:$0xff]
    %v1863 = vld [vmem:[#allocation7 + $0x68] sm:$0xff]
    %v1864 = vld [vmem:[#allocation7 + $0x70] sm:$0xff]
    %v1865 = vld [vmem:[#allocation7 + $0x78] sm:$0xff]
    %v1866 = vld [vmem:[#allocation7 + $0x80] sm:$0xff]
    %v1867 = vld [vmem:[#allocation7 + $0x88] sm:$0xff]
    %v1868 = vld [vmem:[#allocation7 + $0x90] sm:$0xff]
    %v1869 = vld [vmem:[#allocation7 + $0x98] sm:$0xff]
    %v1870 = vld [vmem:[#allocation7 + $0xa0] sm:$0xff]
    %v1871 = vld [vmem:[#allocation7 + $0xa8] sm:$0xff]
    %v1872 = vld [vmem:[#allocation7 + $0xb0] sm:$0xff]
    %v1873 = vld [vmem:[#allocation7 + $0xb8] sm:$0xff]
    %v1874 = vld [vmem:[#allocation7 + $0xc0] sm:$0xff]
    %v1875 = vld [vmem:[#allocation7 + $0xc8] sm:$0xff]
    %v1876 = vld [vmem:[#allocation7 + $0xd0] sm:$0xff]
    %v1877 = vld [vmem:[#allocation7 + $0xd8] sm:$0xff]
    %v1878 = vld [vmem:[#allocation7 + $0xe0] sm:$0xff]
    %v1879 = vld [vmem:[#allocation7 + $0xe8] sm:$0xff]
    %v1880 = vld [vmem:[#allocation7 + $0xf0] sm:$0xff]
    %v1881 = vld [vmem:[#allocation7 + $0xf8] sm:$0xff]
    %v1882 = vld [vmem:[%s8] sm:$0x3]
    %v1884 = vlaneseq
    %v1885 = vshrl.u32 %v1884, 7
    %v1886 = vsub.s32 0, %v1885
    %v1887 = vrot.slane %v1882, %v1886
    %v1888 = vlaneseq
    %v1889 = vshrl.u32 %v1888, 7
    %v1890 = vsub.s32 1, %v1889
    %v1891 = vrot.slane %v1882, %v1890
    %v1926 = vunpack.c.l.b16 %v1850
    %v1927 = vunpack.c.h.b16 %v1850
    %v1928 = vunpack.c.l.b16 %v1851
    %v1929 = vunpack.c.h.b16 %v1851
    %v1930 = vunpack.c.l.b16 %v1852
    %v1931 = vunpack.c.h.b16 %v1852
    %v1932 = vunpack.c.l.b16 %v1853
    %v1933 = vunpack.c.h.b16 %v1853
    %v1934 = vunpack.c.l.b16 %v1854
    %v1935 = vunpack.c.h.b16 %v1854
    %v1936 = vunpack.c.l.b16 %v1855
    %v1937 = vunpack.c.h.b16 %v1855
    %v1938 = vunpack.c.l.b16 %v1856
    %v1939 = vunpack.c.h.b16 %v1856
    %v1940 = vunpack.c.l.b16 %v1857
    %v1941 = vunpack.c.h.b16 %v1857
    %v1942 = vunpack.c.l.b16 %v1858
    %v1943 = vunpack.c.h.b16 %v1858
    %v1944 = vunpack.c.l.b16 %v1859
    %v1945 = vunpack.c.h.b16 %v1859
    %v1946 = vunpack.c.l.b16 %v1860
    %v1947 = vunpack.c.h.b16 %v1860
    %v1948 = vunpack.c.l.b16 %v1861
    %v1949 = vunpack.c.h.b16 %v1861
    %v1950 = vunpack.c.l.b16 %v1862
    %v1951 = vunpack.c.h.b16 %v1862
    %v1952 = vunpack.c.l.b16 %v1863
    %v1953 = vunpack.c.h.b16 %v1863
    %v1954 = vunpack.c.l.b16 %v1864
    %v1955 = vunpack.c.h.b16 %v1864
    %v1956 = vunpack.c.l.b16 %v1865
    %v1957 = vunpack.c.h.b16 %v1865
    %v1958 = vunpack.c.l.b16 %v1866
    %v1959 = vunpack.c.h.b16 %v1866
    %v1960 = vunpack.c.l.b16 %v1867
    %v1961 = vunpack.c.h.b16 %v1867
    %v1962 = vunpack.c.l.b16 %v1868
    %v1963 = vunpack.c.h.b16 %v1868
    %v1964 = vunpack.c.l.b16 %v1869
    %v1965 = vunpack.c.h.b16 %v1869
    %v1966 = vunpack.c.l.b16 %v1870
    %v1967 = vunpack.c.h.b16 %v1870
    %v1968 = vunpack.c.l.b16 %v1871
    %v1969 = vunpack.c.h.b16 %v1871
    %v1970 = vunpack.c.l.b16 %v1872
    %v1971 = vunpack.c.h.b16 %v1872
    %v1972 = vunpack.c.l.b16 %v1873
    %v1973 = vunpack.c.h.b16 %v1873
    %v1974 = vunpack.c.l.b16 %v1874
    %v1975 = vunpack.c.h.b16 %v1874
    %v1976 = vunpack.c.l.b16 %v1875
    %v1977 = vunpack.c.h.b16 %v1875
    %v1978 = vunpack.c.l.b16 %v1876
    %v1979 = vunpack.c.h.b16 %v1876
    %v1980 = vunpack.c.l.b16 %v1877
    %v1981 = vunpack.c.h.b16 %v1877
    %v1982 = vunpack.c.l.b16 %v1878
    %v1983 = vunpack.c.h.b16 %v1878
    %v1984 = vunpack.c.l.b16 %v1879
    %v1985 = vunpack.c.h.b16 %v1879
    %v1986 = vunpack.c.l.b16 %v1880
    %v1987 = vunpack.c.h.b16 %v1880
    %v1988 = vunpack.c.l.b16 %v1881
    %v1989 = vunpack.c.h.b16 %v1881
    %v1990 = vpack.c.b16 %v1928, %v1926
    %v1991 = vpack.c.b16 %v1929, %v1927
    %v1992 = vpack.c.b16 %v1932, %v1930
    %v1993 = vpack.c.b16 %v1933, %v1931
    %v1994 = vpack.c.b16 %v1936, %v1934
    %v1995 = vpack.c.b16 %v1937, %v1935
    %v1996 = vpack.c.b16 %v1940, %v1938
    %v1997 = vpack.c.b16 %v1941, %v1939
    %v1998 = vpack.c.b16 %v1944, %v1942
    %v1999 = vpack.c.b16 %v1945, %v1943
    %v2000 = vpack.c.b16 %v1948, %v1946
    %v2001 = vpack.c.b16 %v1949, %v1947
    %v2002 = vpack.c.b16 %v1952, %v1950
    %v2003 = vpack.c.b16 %v1953, %v1951
    %v2004 = vpack.c.b16 %v1956, %v1954
    %v2005 = vpack.c.b16 %v1957, %v1955
    %v2006 = vpack.c.b16 %v1960, %v1958
    %v2007 = vpack.c.b16 %v1961, %v1959
    %v2008 = vpack.c.b16 %v1964, %v1962
    %v2009 = vpack.c.b16 %v1965, %v1963
    %v2010 = vpack.c.b16 %v1968, %v1966
    %v2011 = vpack.c.b16 %v1969, %v1967
    %v2012 = vpack.c.b16 %v1972, %v1970
    %v2013 = vpack.c.b16 %v1973, %v1971
    %v2014 = vpack.c.b16 %v1976, %v1974
    %v2015 = vpack.c.b16 %v1977, %v1975
    %v2016 = vpack.c.b16 %v1980, %v1978
    %v2017 = vpack.c.b16 %v1981, %v1979
    %v2018 = vpack.c.b16 %v1984, %v1982
    %v2019 = vpack.c.b16 %v1985, %v1983
    %v2020 = vpack.c.b16 %v1988, %v1986
    %v2021 = vpack.c.b16 %v1989, %v1987
    %2054 = vmatprep.subr.bf16.mxu0 %v2005
    %2055 = vmatpush1.bf16.msra.mxu0 %v2004
    %2056 = vmatprep.subr.bf16.mxu0 %v2003
    %2057 = vmatpush1.bf16.msra.mxu0 %v2002
    %2058 = vmatprep.subr.bf16.mxu0 %v2001
    %2059 = vmatpush1.bf16.msra.mxu0 %v2000
    %2060 = vmatprep.subr.bf16.mxu0 %v1999
    %2061 = vmatpush1.bf16.msra.mxu0 %v1998
    %2062 = vmatprep.subr.bf16.mxu0 %v1997
    %2063 = vmatpush1.bf16.msra.mxu0 %v1996
    %2064 = vmatprep.subr.bf16.mxu0 %v1995
    %2065 = vmatpush1.bf16.msra.mxu0 %v1994
    %2066 = vmatprep.subr.bf16.mxu0 %v1993
    %2067 = vmatpush1.bf16.msra.mxu0 %v1992
    %2068 = vmatprep.subr.bf16.mxu0 %v1991
    %2069 = vmatpush1.bf16.msra.mxu0 %v1990
    %2070 = vmatprep.subr.bf16.mxu0 %v2021
    %2071 = vmatpush2.bf16.msra.mxu0 %v2020
    %2072 = vmatprep.subr.bf16.mxu0 %v2019
    %2073 = vmatpush2.bf16.msra.mxu0 %v2018
    %2074 = vmatprep.subr.bf16.mxu0 %v2017
    %2075 = vmatpush2.bf16.msra.mxu0 %v2016
    %2076 = vmatprep.subr.bf16.mxu0 %v2015
    %2077 = vmatpush2.bf16.msra.mxu0 %v2014
    %2078 = vmatprep.subr.bf16.mxu0 %v2013
    %2079 = vmatpush2.bf16.msra.mxu0 %v2012
    %2080 = vmatprep.subr.bf16.mxu0 %v2011
    %2081 = vmatpush2.bf16.msra.mxu0 %v2010
    %2082 = vmatprep.subr.bf16.mxu0 %v2009
    %2083 = vmatpush2.bf16.msra.mxu0 %v2008
    %2084 = vmatprep.subr.bf16.mxu0 %v2007
    %2085 = vmatpush2.bf16.msra.mxu0 %v2006
    %2086 = vmatprep.mubr.bf16.mxu0 %v1849
    %2087 = vmatmul.mubr.bf16.gmra.mxu0 %v1848
    %v2088 = vpop.f32.mrf.mxu0
    %v2089 = vadd.f32 %v1887, %v2088
    %v2090 = vpop.f32.mrf.mxu0
    %v2091 = vadd.f32 %v1891, %v2090
    %v2092 = vpop.f32.mrf.mxu0
    %v2093 = vadd.f32 %v1887, %v2092
    %v2094 = vpop.f32.mrf.mxu0
    %v2095 = vadd.f32 %v1891, %v2094
    %2096 = vdwg.mxu0
    %v2097 = vmax.f32 %v2089, 0.0
    %v2098 = vmax.f32 %v2091, 0.0
    %v2099 = vmax.f32 %v2093, 0.0
    %v2100 = vmax.f32 %v2095, 0.0
    %v2101 = vadd.f32 %v2097, %v2098
    %2102 = vadd.xlane.f32.xlu0 %v2101
    %v2103 = vpop.xlane.xlu0 %2102
    %v2104 = vadd.f32 %v2099, %v2100
    %2105 = vadd.xlane.f32.xlu0 %v2104
    %v2106 = vpop.xlane.xlu0 %2105
    %v2107 = vmul.f32 %v2097, %v2097
    %v2108 = vmul.f32 %v2098, %v2098
    %v2109 = vmul.f32 %v2099, %v2099
    %v2110 = vmul.f32 %v2100, %v2100
    %v2111 = vadd.f32 %v2107, %v2108
    %2112 = vadd.xlane.f32.xlu0 %v2111
    %v2113 = vpop.xlane.xlu0 %2112
    %v2114 = vadd.f32 %v2109, %v2110
    %2115 = vadd.xlane.f32.xlu0 %v2114
    %v2116 = vpop.xlane.xlu0 %2115
    %v2117 = vmul.f32 %v2103, 0.00390625
    %v2118 = vmul.f32 %v2106, 0.00390625
    %v2119 = vmul.f32 %v2113, 0.00390625
    %v2120 = vmul.f32 %v2116, 0.00390625
    %v2121 = vmul.f32 %v2117, %v2117
    %v2122 = vmul.f32 %v2118, %v2118
    %v2123 = vsub.f32 %v2119, %v2121
    %v2124 = vsub.f32 %v2120, %v2122
    %v2125 = vmax.f32 %v2123, 0.0
    %v2126 = vmax.f32 %v2124, 0.0
    %v2127 = vsub.f32 %v2097, %v2117
    %v2128 = vsub.f32 %v2098, %v2117
    %v2129 = vsub.f32 %v2099, %v2118
    %v2130 = vsub.f32 %v2100, %v2118
    %v2131 = vadd.f32 %v2125, 1e-05
    %v2132 = vadd.f32 %v2126, 1e-05
    %v2133 = vrsqrt.pop %v2131
    %v2134 = vrsqrt.pop %v2132
    %v2135 = vmul.f32 %v2127, %v2133
    %v2136 = vmul.f32 %v2128, %v2133
    %v2137 = vmul.f32 %v2129, %v2134
    %v2138 = vmul.f32 %v2130, %v2134
    %v2139 = vld [vmem:[%s9] sm:$0x3]
    %v2141 = vlaneseq
    %v2142 = vshrl.u32 %v2141, 7
    %v2143 = vsub.s32 0, %v2142
    %v2144 = vrot.slane %v2139, %v2143
    %v2145 = vlaneseq
    %v2146 = vshrl.u32 %v2145, 7
    %v2147 = vsub.s32 1, %v2146
    %v2148 = vrot.slane %v2139, %v2147
    %v2151 = vmul.f32 %v2135, %v2144
    %v2152 = vmul.f32 %v2136, %v2148
    %v2153 = vmul.f32 %v2137, %v2144
    %v2154 = vmul.f32 %v2138, %v2148
    %v2155 = vadd.f32 %v2151, %v2152
    %2156 = vadd.xlane.f32.xlu0 %v2155
    %v2157 = vpop.xlane.xlu0 %2156
    %v2158 = vadd.f32 %v2153, %v2154
    %2159 = vadd.xlane.f32.xlu0 %v2158
    %v2160 = vpop.xlane.xlu0 %2159
    %v2161 = vld [vmem:[#allocation2] sm:$0x1]
    %v2163 = vlaneseq
    %v2164 = vshrl.u32 %v2163, 7
    %v2165 = vsub.s32 0, %v2164
    %v2166 = vrot.slane %v2161, %v2165
    %v2168 = vadd.f32 %v2157, %v2166
    %v2169 = vadd.f32 %v2160, %v2166
    %vm2170 = vcmask 7168
    %2171 = vst.msk [vmem:[%s11] sm:$0xff] %vm2170, %v2168
    %2172 = vst.msk [vmem:[%s11 + $0x8] sm:$0xff] %vm2170, %v2169
    // Predicated region
    $region58: #{tpu_custom_call.1} parent=1 // pred_check
      _
    $region59: #{tpu_custom_call.1} parent=1 // pred_check_branch
      %2174 = sbr.rel (0) target = $region61
    $region60: #{tpu_custom_call.1} parent=1 // pred_region
      _
    $region61: #{tpu_custom_call.1} parent=1 // pred_fallthru
      _
    // Predicated region
    $region62: #{tpu_custom_call.1} parent=1 // pred_check
      _
    $region63: #{tpu_custom_call.1} parent=1 // pred_check_branch
      %2176 = sbr.rel (0) target = $region65
    $region64: #{tpu_custom_call.1} parent=1 // pred_region
      _
    $region65: #{tpu_custom_call.1} parent=1 // pred_fallthru
      _
    %2177 = vsyncpa [#allocation4], 1
    %2178 = vsyncpa [#allocation6], 1

</llo_original>
